<compile_context>
chip_gen: v7x
topology: tpu7x:2x2x1
jax: 0.10.0
libtpu: 0.0.40
codegen_flags: <defaults>
</compile_context>

<pallas_src>
import functools

import jax
import jax.numpy as jnp
from jax.experimental import pallas as pl
from jax.experimental.pallas import tpu as pltpu


# ---------------------------------------------------------------------------
# VMEM accounting & tile selection (perf review items: padded accounting,
# generation-aware budget, >=2 grid steps, T tiling).
# ---------------------------------------------------------------------------

def _round_up(v: int, m: int) -> int:
    return -(-v // m) * m


def _divisors(n: int):
    return [d for d in range(1, n + 1) if n % d == 0]


def _sublane_quantum(dtype) -> int:
    # f32 -> 8 sublanes, bf16 -> 16, int8/fp8 -> 32 (sub-32-bit packs along sublanes).
    return max(8, 32 // dtype.itemsize)


def _padded_block_bytes(block_shape, dtype) -> int:
    """VMEM bytes of one block after (sublane, lane) padding — not logical bytes."""
    dims = list(block_shape)
    dims[-1] = _round_up(dims[-1], 128)
    if len(dims) >= 2:
        dims[-2] = _round_up(dims[-2], _sublane_quantum(dtype))
    n = 1
    for d in dims:
        n *= d
    return n * dtype.itemsize


def _vmem_budgets():
    """(block-footprint budget, explicit scoped-VMEM limit) for this TPU generation."""
    try:
        cap = int(pltpu.get_tpu_info().vmem_capacity_bytes)  # 128 MiB v5e/v6e, 64 MiB/TC v7x
    except Exception:
        cap = 64 << 20                                       # conservative: v7x per-core VMEM
    vmem_limit = cap // 2            # 32 MiB on v7x, 64 MiB on v5e/v6e
    budget = (vmem_limit * 3) // 4   # ~25% headroom for Mosaic-internal scratch
    return budget, vmem_limit


def _choose_tiles(B, T, dtype, in_block, out_block, bb_candidates, budget):
    """Pick (bb, tT): fit the padded, double-buffered footprint in `budget`,
    prefer >=2 grid steps (v7x megacore + pipelining), then the largest block
    (bigger tiles push a mem-bound kernel toward the HBM roofline)."""
    tt_candidates = sorted({t for t in range(128, T + 1, 128) if T % t == 0} | {T})

    def footprint(bb, tT):
        inb = _padded_block_bytes(in_block(bb, tT), dtype)
        outb = _padded_block_bytes(out_block(bb, tT), dtype)
        # 2x double-buffered DMA windows per operand + ~1 block each of in-kernel
        # temporaries (permuted rows / transposed tile).
        return 3 * inb + 3 * outb

    def score(cand):
        bb, tT = cand
        fp = footprint(bb, tT)
        fits = fp <= budget
        steps = (B // bb) * (T // tT)
        return (fits, fits and steps >= 2, bb * tT if fits else -fp)

    cands = [(bb, tT) for bb in bb_candidates for tT in tt_candidates]
    # TODO(synk): if even the smallest candidate exceeds `budget` (huge C*IQ*T),
    # additionally tile the C*IQ axis instead of relying on the scoped-VMEM limit.
    return max(cands, key=score)


# ---------------------------------------------------------------------------
# Kernels (preserve_time=True): per batch this is a (C*IQ, T) -> (T, IQ*C)
# transpose combined with the C<->IQ row permutation.
# ---------------------------------------------------------------------------

def _permuted_rows(x_ref, C: int, IQ: int):
    """(bb, C*IQ, tT) block (row r = c*IQ + iq) -> (bb, F, tT) with rows ordered
    f = iq*C + c (the torch transpose(1, 3) feature order).  One dense load,
    static sublane slices + a single sublane-axis concat: no lane shuffles."""
    xv = x_ref[...]
    if C == 1 or IQ == 1:
        return xv                                   # permutation is the identity
    rows = [xv[:, c * IQ + iq: c * IQ + iq + 1, :]
            for iq in range(IQ) for c in range(C)]
    return jnp.concatenate(rows, axis=1)


def _flatten_pt_kernel_lane_dense(x_ref, o_ref, *, C: int, IQ: int):
    # x_ref: (bb, C*IQ, tT) -> o_ref: (bb, tT * IQ*C)   lane-dense slab
    bb, F, tT = x_ref.shape
    y = _permuted_rows(x_ref, C, IQ)                 # (bb, F, tT)
    z = jnp.transpose(y, (0, 2, 1))                  # (bb, tT, F): batched XLU transpose
    # Collapse (tT, F) into one dense lane dim so the writeback uses full-width
    # stores and a dense VMEM->HBM DMA instead of F-of-128-lane masked stores.
    o_ref[...] = z.reshape(bb, tT * F)


def _flatten_pt_kernel_blocked(x_ref, o_ref, *, C: int, IQ: int):
    # x_ref: (bb, C*IQ, tT) -> o_ref: (bb, tT, IQ*C)
    y = _permuted_rows(x_ref, C, IQ)
    o_ref[...] = jnp.transpose(y, (0, 2, 1))


def _call_flatten_pt(xr, B, C, IQ, T, *, lane_dense: bool):
    F = C * IQ
    dtype = xr.dtype
    budget, vmem_limit = _vmem_budgets()
    nbytes = 2 * B * F * T * dtype.itemsize          # pure movement: 1 read + 1 write

    if lane_dense:
        # Output block is 2-D (bb, tT*F): its second-to-last dim is bb, so keep
        # bb a multiple of the sublane quantum or equal to B ((8,128) rule).
        q = _sublane_quantum(dtype)
        bb_cands = sorted({d for d in _divisors(B) if d % q == 0} | {B})
        out_shape = jax.ShapeDtypeStruct((B, T * F), dtype)
        out_block = lambda bb, tT: (bb, tT * F)
        kernel = _flatten_pt_kernel_lane_dense
    else:
        bb_cands = _divisors(B)
        out_shape = jax.ShapeDtypeStruct((B, T, F), dtype)
        out_block = lambda bb, tT: (bb, tT, F)
        kernel = _flatten_pt_kernel_blocked

    bb, tT = _choose_tiles(B, T, dtype,
                           in_block=lambda bb, tT: (bb, F, tT),
                           out_block=out_block,
                           bb_candidates=bb_cands, budget=budget)

    if lane_dense:
        out_spec = pl.BlockSpec((bb, tT * F), lambda b, t: (b, t))
    else:
        out_spec = pl.BlockSpec((bb, tT, F), lambda b, t: (b, t, 0))

    out = pl.pallas_call(
        functools.partial(kernel, C=C, IQ=IQ),
        out_shape=out_shape,
        grid=(B // bb, T // tT),
        in_specs=[pl.BlockSpec((bb, F, tT), lambda b, t: (b, 0, t))],
        out_specs=out_spec,
        compiler_params=pltpu.CompilerParams(
            # Batch and time grid axes are fully independent -> shardable across
            # v7x's two TensorCores; harmless no-op on single-core v5e/v6e.
            dimension_semantics=("parallel", "parallel"),
            vmem_limit_bytes=vmem_limit),
        # Zero FLOPs, pure memory traffic: helps XLA schedule around this call.
        cost_estimate=pl.CostEstimate(flops=0, transcendentals=0,
                                      bytes_accessed=nbytes),
    )(xr)

    if lane_dense:
        out = jnp.reshape(out, (B, T, F))            # free metadata reshape
    return out


# None = not probed yet; False = this Mosaic build rejected the lane compaction.
_LANE_DENSE_OK = None


def flatten(x, preserve_time: bool = False):
    """JAX/Pallas equivalent of the PyTorch Flatten module's forward."""
    global _LANE_DENSE_OK

    if not preserve_time:
        if x.ndim < 2:
            raise ValueError(
                "The inputs to the Flatten layer must have at least 2 dimensions "
                f"(e.g. BxCxIQxT), input shape was {x.shape}")
        # Row-major flatten is metadata-only: no kernel, no extra HBM round trip.
        return jnp.reshape(x, (x.shape[0], -1))

    if x.ndim != 4:
        raise ValueError(
            "The inputs to the Flatten layer must have 4 dimensions "
            f"(e.g. BxCxIQxT), input shape was {x.shape}")

    B, C, IQ, T = x.shape
    F = C * IQ
    # Sublane-dense input view: free row-major collapse of (C, IQ) -> C*IQ.
    xr = jnp.reshape(x, (B, F, T))

    if F % 128 == 0:
        # The (bb, tT, F) output block is already lane-dense.
        return _call_flatten_pt(xr, B, C, IQ, T, lane_dense=False)

    if _LANE_DENSE_OK:
        return _call_flatten_pt(xr, B, C, IQ, T, lane_dense=True)
    if _LANE_DENSE_OK is None:
        try:
            out = _call_flatten_pt(xr, B, C, IQ, T, lane_dense=True)
            jax.block_until_ready(out)   # surface any lowering failure inside the probe
            _LANE_DENSE_OK = True
            return out
        except Exception:
            _LANE_DENSE_OK = False

    # TODO(synk): this Mosaic build rejected the in-kernel (tT, F) -> (tT*F,) lane
    # compaction; falling back to the 3-D-output kernel (correct, but F-of-128
    # masked stores when F < 128).
    return _call_flatten_pt(xr, B, C, IQ, T, lane_dense=False)


if __name__ == "__main__":
    key = jax.random.PRNGKey(0)
    B, C, IQ, T = 2, 4, 2, 256
    x = jax.random.normal(key, (B, C, IQ, T), dtype=jnp.float32)

    # preserve_time=False : (B, C*IQ*T) — metadata-only reshape, no kernel.
    y0 = jax.block_until_ready(flatten(x, preserve_time=False))
    assert y0.shape == (B, C * IQ * T), y0.shape
    assert jnp.array_equal(y0, jnp.reshape(x, (B, -1))), "preserve_time=False mismatch"

    # preserve_time=True : (B, T, IQ*C) — Pallas transpose kernel, grid (1, 2) here.
    ref1 = jnp.reshape(jnp.transpose(x, (0, 3, 2, 1)), (B, T, -1))
    y1 = jax.block_until_ready(flatten(x, preserve_time=True))
    assert y1.shape == (B, T, IQ * C), y1.shape
    assert jnp.array_equal(y1, ref1), "preserve_time=True mismatch"

    # Second shape: exercises batch tiling (grid over B) and different C/IQ.
    x2 = jax.random.normal(jax.random.PRNGKey(0), (16, 2, 2, 128), dtype=jnp.float32)
    ref2 = jnp.reshape(jnp.transpose(x2, (0, 3, 2, 1)), (16, 128, -1))
    y2 = jax.block_until_ready(flatten(x2, preserve_time=True))
    assert y2.shape == (16, 128, 4), y2.shape
    assert jnp.array_equal(y2, ref2), "preserve_time=True (batch-tiled) mismatch"

    print("KERNEL_OK")
</pallas_src>

<mosaic_0001>
module attributes {stable_mosaic.version = 11 : i64} {
  func.func @_flatten_pt_kernel_lane_dense(%arg0: i32, %arg1: i32, %arg2: memref<2x8x128xf32, #tpu.memory_space<vmem>>, %arg3: memref<2x1024xf32, #tpu.memory_space<vmem>>) attributes {dimension_semantics = [#tpu.dimension_semantics<parallel>, #tpu.dimension_semantics<parallel>], iteration_bounds = array<i64: 1, 2>, scalar_prefetch = 0 : i64, scratch_operands = 0 : i64, tpu.core_type = #tpu.core_type<tc>, window_params = [{transform_indices = @transform_0, window_bounds = array<i64: 2, 8, 128>}, {transform_indices = @transform_1, window_bounds = array<i64: 2, 1024>}]} {
    %c0 = arith.constant 0 : index
    %c0_0 = arith.constant 0 : index
    %c0_1 = arith.constant 0 : index
    %0 = vector.load %arg2[%c0, %c0_0, %c0_1] : memref<2x8x128xf32, #tpu.memory_space<vmem>>, vector<2x8x128xf32>
    %1 = vector.extract_strided_slice %0 {offsets = [0, 0, 0], sizes = [2, 1, 128], strides = [1, 1, 1]} : vector<2x8x128xf32> to vector<2x1x128xf32>
    %2 = vector.extract_strided_slice %0 {offsets = [0, 2, 0], sizes = [2, 1, 128], strides = [1, 1, 1]} : vector<2x8x128xf32> to vector<2x1x128xf32>
    %3 = vector.extract_strided_slice %0 {offsets = [0, 4, 0], sizes = [2, 1, 128], strides = [1, 1, 1]} : vector<2x8x128xf32> to vector<2x1x128xf32>
    %4 = vector.extract_strided_slice %0 {offsets = [0, 6, 0], sizes = [2, 1, 128], strides = [1, 1, 1]} : vector<2x8x128xf32> to vector<2x1x128xf32>
    %5 = vector.extract_strided_slice %0 {offsets = [0, 1, 0], sizes = [2, 1, 128], strides = [1, 1, 1]} : vector<2x8x128xf32> to vector<2x1x128xf32>
    %6 = vector.extract_strided_slice %0 {offsets = [0, 3, 0], sizes = [2, 1, 128], strides = [1, 1, 1]} : vector<2x8x128xf32> to vector<2x1x128xf32>
    %7 = vector.extract_strided_slice %0 {offsets = [0, 5, 0], sizes = [2, 1, 128], strides = [1, 1, 1]} : vector<2x8x128xf32> to vector<2x1x128xf32>
    %8 = vector.extract_strided_slice %0 {offsets = [0, 7, 0], sizes = [2, 1, 128], strides = [1, 1, 1]} : vector<2x8x128xf32> to vector<2x1x128xf32>
    %9 = tpu.concatenate %1, %2, %3, %4, %5, %6, %7, %8 in 1 : vector<2x1x128xf32>, vector<2x1x128xf32>, vector<2x1x128xf32>, vector<2x1x128xf32>, vector<2x1x128xf32>, vector<2x1x128xf32>, vector<2x1x128xf32>, vector<2x1x128xf32> -> vector<2x8x128xf32>
    %10 = tpu.transpose %9, [0, 2, 1] : vector<2x8x128xf32> -> vector<2x128x8xf32>
    %11 = vector.shape_cast %10 : vector<2x128x8xf32> to vector<2x1024xf32>
    %c0_2 = arith.constant 0 : index
    %c0_3 = arith.constant 0 : index
    %12 = vector.load %arg3[%c0_2, %c0_3] : memref<2x1024xf32, #tpu.memory_space<vmem>>, vector<2x1024xf32>
    tpu.vector_store %arg3[%c0_2, %c0_3], %11 {strides = array<i32>} : memref<2x1024xf32, #tpu.memory_space<vmem>>, vector<2x1024xf32>,
    return
  }
  func.func @transform_0(%arg0: i32, %arg1: i32) -> (i32, i32, i32) {
    %c0_i32 = arith.constant 0 : i32
    %c0_i32_0 = arith.constant 0 : i32
    return %arg0, %c0_i32, %arg1 : i32, i32, i32
  }
  func.func @transform_1(%arg0: i32, %arg1: i32) -> (i32, i32) {
    %c0_i32 = arith.constant 0 : i32
    return %arg0, %arg1 : i32, i32
  }
}

module attributes {stable_mosaic.version = 11 : i64} {
  func.func @_flatten_pt_kernel_blocked(%arg0: i32, %arg1: i32, %arg2: memref<1x8x256xf32, #tpu.memory_space<vmem>>, %arg3: memref<1x256x8xf32, #tpu.memory_space<vmem>>) attributes {dimension_semantics = [#tpu.dimension_semantics<parallel>, #tpu.dimension_semantics<parallel>], iteration_bounds = array<i64: 2, 1>, scalar_prefetch = 0 : i64, scratch_operands = 0 : i64, tpu.core_type = #tpu.core_type<tc>, window_params = [{transform_indices = @transform_0, window_bounds = array<i64: 1, 8, 256>}, {transform_indices = @transform_1, window_bounds = array<i64: 1, 256, 8>}]} {
    %c0 = arith.constant 0 : index
    %c0_0 = arith.constant 0 : index
    %c0_1 = arith.constant 0 : index
    %0 = vector.load %arg2[%c0, %c0_0, %c0_1] : memref<1x8x256xf32, #tpu.memory_space<vmem>>, vector<1x8x256xf32>
    %1 = vector.extract_strided_slice %0 {offsets = [0, 0, 0], sizes = [1, 1, 256], strides = [1, 1, 1]} : vector<1x8x256xf32> to vector<1x1x256xf32>
    %2 = vector.extract_strided_slice %0 {offsets = [0, 2, 0], sizes = [1, 1, 256], strides = [1, 1, 1]} : vector<1x8x256xf32> to vector<1x1x256xf32>
    %3 = vector.extract_strided_slice %0 {offsets = [0, 4, 0], sizes = [1, 1, 256], strides = [1, 1, 1]} : vector<1x8x256xf32> to vector<1x1x256xf32>
    %4 = vector.extract_strided_slice %0 {offsets = [0, 6, 0], sizes = [1, 1, 256], strides = [1, 1, 1]} : vector<1x8x256xf32> to vector<1x1x256xf32>
    %5 = vector.extract_strided_slice %0 {offsets = [0, 1, 0], sizes = [1, 1, 256], strides = [1, 1, 1]} : vector<1x8x256xf32> to vector<1x1x256xf32>
    %6 = vector.extract_strided_slice %0 {offsets = [0, 3, 0], sizes = [1, 1, 256], strides = [1, 1, 1]} : vector<1x8x256xf32> to vector<1x1x256xf32>
    %7 = vector.extract_strided_slice %0 {offsets = [0, 5, 0], sizes = [1, 1, 256], strides = [1, 1, 1]} : vector<1x8x256xf32> to vector<1x1x256xf32>
    %8 = vector.extract_strided_slice %0 {offsets = [0, 7, 0], sizes = [1, 1, 256], strides = [1, 1, 1]} : vector<1x8x256xf32> to vector<1x1x256xf32>
    %9 = tpu.concatenate %1, %2, %3, %4, %5, %6, %7, %8 in 1 : vector<1x1x256xf32>, vector<1x1x256xf32>, vector<1x1x256xf32>, vector<1x1x256xf32>, vector<1x1x256xf32>, vector<1x1x256xf32>, vector<1x1x256xf32>, vector<1x1x256xf32> -> vector<1x8x256xf32>
    %10 = tpu.transpose %9, [0, 2, 1] : vector<1x8x256xf32> -> vector<1x256x8xf32>
    %c0_2 = arith.constant 0 : index
    %c0_3 = arith.constant 0 : index
    %c0_4 = arith.constant 0 : index
    %11 = vector.load %arg3[%c0_2, %c0_3, %c0_4] : memref<1x256x8xf32, #tpu.memory_space<vmem>>, vector<1x256x8xf32>
    tpu.vector_store %arg3[%c0_2, %c0_3, %c0_4], %10 {strides = array<i32>} : memref<1x256x8xf32, #tpu.memory_space<vmem>>, vector<1x256x8xf32>,
    return
  }
  func.func @transform_0(%arg0: i32, %arg1: i32) -> (i32, i32, i32) {
    %c0_i32 = arith.constant 0 : i32
    %c0_i32_0 = arith.constant 0 : i32
    return %arg0, %c0_i32, %arg1 : i32, i32, i32
  }
  func.func @transform_1(%arg0: i32, %arg1: i32) -> (i32, i32, i32) {
    %c0_i32 = arith.constant 0 : i32
    %c0_i32_0 = arith.constant 0 : i32
    return %arg0, %arg1, %c0_i32 : i32, i32, i32
  }
}

</mosaic_0001>

<llo_original>
// kernel: tpu_custom_call.1
$region0: #{tpu_custom_call.1}
  #allocation0 [shape = 'u32[]', space=smem, size = 0x4, offset = 0x4, fixed_abs, tag = 'smem constant byte address 0x4 - core index']
  #allocation1 [shape = 'u32[144,128]{1,0:T(1,128)}', space=vmem, size = 0x12000, scoped, tag = 'internal scratch']
  %s0 = inlined_call_operand.hbm [shape: f32[2,8,256], index: 0, kind: input, shape index: {}]
  %s1 = inlined_call_operand.hbm [shape: f32[2,2048], index: 1, kind: output, shape index: {}]
  %s2 = sld [smem:[#allocation0]]
  $region41: #{tpu_custom_call.1} parent=0
    _
  %s4 = ssub.s32 1, %s2
  %s5 = scalar_select 0, %s4, %s2
  $region1: #{tpu_custom_call.1} parent=0
    #allocation2 [shape = 'u8[16384]{0}', space=vmem, size = 0x4000, scoped, tag = 'input window, operand 0']
    #allocation3 [shape = 's32[2]{0}', space=sflag, size = 0x8, scoped, tag = 'scoped memory for tpu_custom_call.1']
    #allocation4 [shape = 's32[2]{0}', space=sflag, size = 0x8, scoped, tag = 'scoped memory for tpu_custom_call.1']
    #allocation5 [shape = 'u8[16384]{0}', space=vmem, size = 0x4000, scoped, tag = 'output window, operand 0']
    %6 = vsyncpa [#allocation3], 0
    %s7 = scalar_lea.sflag [#allocation3], 1
    %8 = vsyncpa %s7, 0
    %9 = vsyncpa [#allocation4], 0
    %s10 = scalar_lea.sflag [#allocation4], 1
    %11 = vsyncpa %s10, 0
    loop: start=0, step=1, limit=4
    $region2: #{tpu_custom_call.1} parent=1 // loop_pre_header
      _
    $region3: #{tpu_custom_call.1} parent=1 // loop_header
      %s13 = sphi 0, %s17
      %p14 = scmp.ge.s32.totalorder %s13, 4
      %s20 = sphi 0, %s32
      %s21 = sphi 0, %s28
      %s22 = sphi 0, %s20
      %s23 = sphi 0, %s21
      %s24 = sphi 0, %s22
      %s25 = sphi 0, %s23
      %s37 = sphi 0, %s39
      %s40 = sphi 0, %s37
      %s41 = sphi 0, %s40
      %s57 = sphi 0, %s41
      %s65 = sphi 0, %s67
      %s68 = sphi 0, %s65
      %s69 = sphi 0, %s68
      %s85 = sphi 0, %s69
    $region4: #{tpu_custom_call.1} parent=1 // loop_header_branch
      %16 = sbr.rel (%p14) target = $region8
    $region5: #{tpu_custom_call.1} parent=1 // loop_body
      %s18 = ssub.s32 %s13, 1
      %s19 = ssub.s32 %s13, 2
      %s26 = sadd.s32 1, %s21
      %p27 = scmp.ge.s32.totalorder %s26, 2
      %s28 = scalar_select %p27, 0, %s26
      %s29 = sadd.s32 1, %s20
      %s30 = scalar_select %p27, %s29, %s20
      %p31 = scmp.ge.s32.totalorder %s30, 1
      %s32 = scalar_select %p31, 0, %s30
      %s33 = ssub.s32 %s20, %s32
      %s34 = ssub.s32 %s21, %s28
      %s35 = sor.u32 %s33, %s34
      %p36 = scmp.eq.s32.totalorder %s35, 0
      %s38 = sadd.s32 %s37, 1
      %s39 = scalar_select %p36, %s37, %s38
      %p42 = pneg %p36
      %p43 = scmp.eq.s32.totalorder %s13, 1
      %p44 = por %p42, %p43
      %p45 = scmp.ne.s32.totalorder %s37, %s40
      %p46 = scmp.eq.s32.totalorder %s13, 0
      %p47 = por %p45, %p46
      %p48 = scmp.ne.s32.totalorder %s37, %s40
      %p49 = scmp.eq.s32.totalorder %s18, 1
      %p50 = por %p48, %p49
      %p51 = scmp.ne.s32.totalorder %s40, %s41
      %p52 = scmp.eq.s32.totalorder %s18, 0
      %p53 = por %p51, %p52
      %p54 = scmp.ne.s32.totalorder %s40, %s41
      %p55 = scmp.eq.s32.totalorder %s19, 1
      %p56 = por %p54, %p55
      %p58 = scmp.ne.s32.totalorder %s41, %s57
      %p59 = scmp.eq.s32.totalorder %s19, 0
      %p60 = por %p58, %p59
      %s61 = ssub.s32 %s20, %s32
      %s62 = ssub.s32 %s21, %s28
      %s63 = sor.u32 %s61, %s62
      %p64 = scmp.eq.s32.totalorder %s63, 0
      %s66 = sadd.s32 %s65, 1
      %s67 = scalar_select %p64, %s65, %s66
      %p70 = pneg %p64
      %p71 = scmp.eq.s32.totalorder %s13, 1
      %p72 = por %p70, %p71
      %p73 = scmp.ne.s32.totalorder %s65, %s68
      %p74 = scmp.eq.s32.totalorder %s13, 0
      %p75 = por %p73, %p74
      %p76 = scmp.ne.s32.totalorder %s65, %s68
      %p77 = scmp.eq.s32.totalorder %s18, 1
      %p78 = por %p76, %p77
      %p79 = scmp.ne.s32.totalorder %s68, %s69
      %p80 = scmp.eq.s32.totalorder %s18, 0
      %p81 = por %p79, %p80
      %p82 = scmp.ne.s32.totalorder %s68, %s69
      %p83 = scmp.eq.s32.totalorder %s19, 1
      %p84 = por %p82, %p83
      %p86 = scmp.ne.s32.totalorder %s69, %s85
      %p87 = scmp.eq.s32.totalorder %s19, 0
      %p88 = por %p86, %p87
      %p89 = scmp.le.s32.totalorder 1, %s13
      %p90 = scmp.lt.s32.totalorder %s13, 3
      %p91 = pnand %p89, %p90
      %p92 = pneg %p91
      // Predicated region
      $region9: #{tpu_custom_call.1} parent=5 // pred_check
        _
      $region10: #{tpu_custom_call.1} parent=5 // pred_check_branch
        %94 = sbr.rel (%p91) target = $region12
      $region11: #{tpu_custom_call.1} parent=5 // pred_region
        %s95 = ssub.s32 %s13, 1
      $region12: #{tpu_custom_call.1} parent=5 // pred_fallthru
        _
      %p96 = scmp.lt.s32.totalorder %s13, 2
      // Predicated region
      $region13: #{tpu_custom_call.1} parent=5 // pred_check
        %p97 = pneg %p96
      $region14: #{tpu_custom_call.1} parent=5 // pred_check_branch
        %99 = sbr.rel (%p97) target = $region16
      $region15: #{tpu_custom_call.1} parent=5 // pred_region
        // Predicated region
        $region17: #{tpu_custom_call.1} parent=15 // pred_check
          %p100 = pneg %p47
        $region18: #{tpu_custom_call.1} parent=15 // pred_check_branch
          %102 = sbr.rel (%p100) target = $region20
        $region19: #{tpu_custom_call.1} parent=15 // pred_region
          %s103 = sand.u32 %s37, 1
          %s104 = scalar_lea.sflag [#allocation3], %s103
          %s105 = sand.u32 %s37, 1
          %s106 = smul.addr %s105, 16
          %s107 = scalar_lea.vmem [#allocation2], %s106
          %s108 = smul.u32 2, %s20
          %s110 = ssub.s32 256, 256
          %111 = vsyncadd %s104, %s110
          %s112 = smul.addr %s108, 2
          %s113 = sadd.s32 %s21, %s112
          %s114 = smul.addr %s113, 128
          %s115 = scalar_lea.hbm %s0, %s114
          %s116 = sshll.u32 %s107, 4
          %s117 = int_to_ptr.vmem [resolvable:$true] %s116
          %122 = dma.hbm_to_vmem [thread:$0]  %s115, 256, %s117, %s104, 256, 128, 8
        $region20: #{tpu_custom_call.1} parent=15 // pred_fallthru
          _
      $region16: #{tpu_custom_call.1} parent=5 // pred_fallthru
        _
      %p123 = scmp.le.s32.totalorder 1, %s13
      %p124 = scmp.lt.s32.totalorder %s13, 3
      %p125 = pnand %p123, %p124
      %p126 = pneg %p125
      // Predicated region
      $region21: #{tpu_custom_call.1} parent=5 // pred_check
        _
      $region22: #{tpu_custom_call.1} parent=5 // pred_check_branch
        %128 = sbr.rel (%p125) target = $region24
      $region23: #{tpu_custom_call.1} parent=5 // pred_region
        %s129 = ssub.s32 %s13, 1
        %s130 = sand.u32 %s40, 1
        %s131 = scalar_lea.sflag [#allocation3], %s130
        %s132 = sand.u32 %s40, 1
        %s133 = smul.addr %s132, 16
        %s134 = scalar_lea.vmem [#allocation2], %s133
        // Predicated region
        $region25: #{tpu_custom_call.1} parent=23 // pred_check
          %p135 = pneg %p53
        $region26: #{tpu_custom_call.1} parent=23 // pred_check_branch
          %137 = sbr.rel (%p135) target = $region28
        $region27: #{tpu_custom_call.1} parent=23 // pred_region
          %138 = dma.done %s131, 256
        $region28: #{tpu_custom_call.1} parent=23 // pred_fallthru
          _
        %s139 = sand.u32 %s40, 1
        %s140 = scalar_lea.sflag [#allocation3], %s139
        %s141 = sand.u32 %s40, 1
        %s142 = smul.addr %s141, 16
        %s143 = scalar_lea.vmem [#allocation2], %s142
        %p144 = pneg %p53
        %p145 = pneg %p50
        %p146 = pneg %p81
        %p147 = pneg %p78
        %s148 = sand.u32 %s68, 1
        %s149 = scalar_lea.sflag [#allocation4], %s148
        %s150 = sand.u32 %s68, 1
        %s151 = smul.addr %s150, 16
        %s152 = scalar_lea.vmem [#allocation5], %s151
        %s153 = smul.u32 2, %s22
        %s154 = smul.u32 8, %s23
        %v155 = vld [vmem:[%s134] sm:$0xff]
        %v156 = vld [vmem:[%s134 + $0x8] sm:$0xff]
        %v159 = vrot.slane %v155, 1
        %v160 = vrot.slane %v156, 1
        %v163 = vrot.slane %v155, 2
        %v164 = vrot.slane %v156, 2
        %v167 = vrot.slane %v155, 3
        %v168 = vrot.slane %v156, 3
        %v171 = vrot.slane %v155, 5
        %v172 = vrot.slane %v156, 5
        %v175 = vrot.slane %v155, 6
        %v176 = vrot.slane %v156, 6
        %v179 = vrot.slane %v155, 7
        %v180 = vrot.slane %v156, 7
        %vm183 = vcmask 1040384
        %v184 = vsel %vm183, %v155, %v159
        %v185 = vsel %vm183, %v156, %v160
        %vm186 = vcmask 1041408
        %v187 = vsel %vm186, %v184, %v163
        %v188 = vsel %vm186, %v185, %v164
        %vm189 = vcmask 1042432
        %v190 = vsel %vm189, %v187, %v167
        %v191 = vsel %vm189, %v188, %v168
        %vm192 = vcmask 1043456
        %v193 = vsel %vm192, %v190, %v171
        %v194 = vsel %vm192, %v191, %v172
        %vm195 = vcmask 1044480
        %v196 = vsel %vm195, %v193, %v175
        %v197 = vsel %vm195, %v194, %v176
        %vm198 = vcmask 1045504
        %v199 = vsel %vm198, %v196, %v179
        %v200 = vsel %vm198, %v197, %v180
        %vm201 = vcmask 1046528
        %v202 = vsel %vm201, %v199, %v155
        %v203 = vsel %vm201, %v200, %v156
        %204 = vxpose.xlu0.b32.start [1/16] %v202, 128
        %205 = vxpose.xlu0.b32.cont [2/16] 0.0, 128
        %206 = vxpose.xlu0.b32.cont [3/16] 0.0, 128
        %207 = vxpose.xlu0.b32.cont [4/16] 0.0, 128
        %208 = vxpose.xlu0.b32.cont [5/16] 0.0, 128
        %209 = vxpose.xlu0.b32.cont [6/16] 0.0, 128
        %210 = vxpose.xlu0.b32.cont [7/16] 0.0, 128
        %211 = vxpose.xlu0.b32.cont [8/16] 0.0, 128
        %212 = vxpose.xlu0.b32.cont [9/16] 0.0, 128
        %213 = vxpose.xlu0.b32.cont [10/16] 0.0, 128
        %214 = vxpose.xlu0.b32.cont [11/16] 0.0, 128
        %215 = vxpose.xlu0.b32.cont [12/16] 0.0, 128
        %216 = vxpose.xlu0.b32.cont [13/16] 0.0, 128
        %217 = vxpose.xlu0.b32.cont [14/16] 0.0, 128
        %218 = vxpose.xlu0.b32.cont [15/16] 0.0, 128
        %219 = vxpose.xlu0.b32.end [16/16] 0.0, 128
        %v220 = vpop.trf.xlu0
        %v221 = vpop.trf.xlu0
        %v222 = vpop.trf.xlu0
        %v223 = vpop.trf.xlu0
        %v224 = vpop.trf.xlu0
        %v225 = vpop.trf.xlu0
        %v226 = vpop.trf.xlu0
        %v227 = vpop.trf.xlu0
        %v228 = vpop.trf.xlu0
        %v229 = vpop.trf.xlu0
        %v230 = vpop.trf.xlu0
        %v231 = vpop.trf.xlu0
        %v232 = vpop.trf.xlu0
        %v233 = vpop.trf.xlu0
        %v234 = vpop.trf.xlu0
        %v235 = vpop.trf.xlu0
        %236 = vxpose.xlu0.b32.start [1/16] %v203, 128
        %237 = vxpose.xlu0.b32.cont [2/16] 0.0, 128
        %238 = vxpose.xlu0.b32.cont [3/16] 0.0, 128
        %239 = vxpose.xlu0.b32.cont [4/16] 0.0, 128
        %240 = vxpose.xlu0.b32.cont [5/16] 0.0, 128
        %241 = vxpose.xlu0.b32.cont [6/16] 0.0, 128
        %242 = vxpose.xlu0.b32.cont [7/16] 0.0, 128
        %243 = vxpose.xlu0.b32.cont [8/16] 0.0, 128
        %244 = vxpose.xlu0.b32.cont [9/16] 0.0, 128
        %245 = vxpose.xlu0.b32.cont [10/16] 0.0, 128
        %246 = vxpose.xlu0.b32.cont [11/16] 0.0, 128
        %247 = vxpose.xlu0.b32.cont [12/16] 0.0, 128
        %248 = vxpose.xlu0.b32.cont [13/16] 0.0, 128
        %249 = vxpose.xlu0.b32.cont [14/16] 0.0, 128
        %250 = vxpose.xlu0.b32.cont [15/16] 0.0, 128
        %251 = vxpose.xlu0.b32.end [16/16] 0.0, 128
        %v252 = vpop.trf.xlu0
        %v253 = vpop.trf.xlu0
        %v254 = vpop.trf.xlu0
        %v255 = vpop.trf.xlu0
        %v256 = vpop.trf.xlu0
        %v257 = vpop.trf.xlu0
        %v258 = vpop.trf.xlu0
        %v259 = vpop.trf.xlu0
        %v260 = vpop.trf.xlu0
        %v261 = vpop.trf.xlu0
        %v262 = vpop.trf.xlu0
        %v263 = vpop.trf.xlu0
        %v264 = vpop.trf.xlu0
        %v265 = vpop.trf.xlu0
        %v266 = vpop.trf.xlu0
        %v267 = vpop.trf.xlu0
        %v268 = vcombine.high %v220, 0.0
        %v270 = vunpack.c.l.s4 1983009808
        %v271 = vunpack.c.0.s8 %v270
        %v272 = vlaneseq
        %v273 = vshrl.u32 %v272, 7
        %v274 = vsub.s32 %v271, %v273
        %v275 = vrot.slane %v220, %v274
        %v277 = vunpack.c.l.s4 1983009808
        %v278 = vunpack.c.0.s8 %v277
        %v279 = vlaneseq
        %v280 = vshrl.u32 %v279, 7
        %v281 = vsub.s32 %v278, %v280
        %v282 = vrot.slane %v268, %v281
        %v283 = vcombine.high %v252, 0.0
        %v285 = vunpack.c.l.s4 1983009808
        %v286 = vunpack.c.0.s8 %v285
        %v287 = vlaneseq
        %v288 = vshrl.u32 %v287, 7
        %v289 = vsub.s32 %v286, %v288
        %v290 = vrot.slane %v252, %v289
        %v292 = vunpack.c.l.s4 1983009808
        %v293 = vunpack.c.0.s8 %v292
        %v294 = vlaneseq
        %v295 = vshrl.u32 %v294, 7
        %v296 = vsub.s32 %v293, %v295
        %v297 = vrot.slane %v283, %v296
        %v298 = vcombine.low %v275, %v290
        %v299 = vcombine.high %v275, %v290
        %v301 = vunpack.c.l.s4 1934713408
        %v302 = vunpack.c.0.s8 %v301
        %v303 = vlaneseq
        %v304 = vshrl.u32 %v303, 7
        %v305 = vsub.s32 %v302, %v304
        %v306 = vrot.slane %v298, %v305
        %v308 = vunpack.c.l.s4 1934713408
        %v309 = vunpack.c.0.s8 %v308
        %v310 = vlaneseq
        %v311 = vshrl.u32 %v310, 7
        %v312 = vsub.s32 %v309, %v311
        %v313 = vrot.slane %v299, %v312
        %v314 = vcombine.low %v282, %v297
        %v315 = vcombine.high %v282, %v297
        %v317 = vunpack.c.l.s4 1934713408
        %v318 = vunpack.c.0.s8 %v317
        %v319 = vlaneseq
        %v320 = vshrl.u32 %v319, 7
        %v321 = vsub.s32 %v318, %v320
        %v322 = vrot.slane %v314, %v321
        %v324 = vunpack.c.l.s4 1934713408
        %v325 = vunpack.c.0.s8 %v324
        %v326 = vlaneseq
        %v327 = vshrl.u32 %v326, 7
        %v328 = vsub.s32 %v325, %v327
        %v329 = vrot.slane %v315, %v328
        %v330 = vcombine.high %v306, 0.0
        %v331 = vcombine.high %v313, 0.0
        %v332 = vcombine.high %v322, 0.0
        %v333 = vcombine.high %v329, 0.0
        %v334 = vcombine.high %v221, 0.0
        %v336 = vunpack.c.l.s4 1983009808
        %v337 = vunpack.c.0.s8 %v336
        %v338 = vlaneseq
        %v339 = vshrl.u32 %v338, 7
        %v340 = vsub.s32 %v337, %v339
        %v341 = vrot.slane %v221, %v340
        %v343 = vunpack.c.l.s4 1983009808
        %v344 = vunpack.c.0.s8 %v343
        %v345 = vlaneseq
        %v346 = vshrl.u32 %v345, 7
        %v347 = vsub.s32 %v344, %v346
        %v348 = vrot.slane %v334, %v347
        %v349 = vcombine.high %v253, 0.0
        %v351 = vunpack.c.l.s4 1983009808
        %v352 = vunpack.c.0.s8 %v351
        %v353 = vlaneseq
        %v354 = vshrl.u32 %v353, 7
        %v355 = vsub.s32 %v352, %v354
        %v356 = vrot.slane %v253, %v355
        %v358 = vunpack.c.l.s4 1983009808
        %v359 = vunpack.c.0.s8 %v358
        %v360 = vlaneseq
        %v361 = vshrl.u32 %v360, 7
        %v362 = vsub.s32 %v359, %v361
        %v363 = vrot.slane %v349, %v362
        %v364 = vcombine.low %v341, %v356
        %v365 = vcombine.high %v341, %v356
        %v367 = vunpack.c.l.s4 1934713408
        %v368 = vunpack.c.0.s8 %v367
        %v369 = vlaneseq
        %v370 = vshrl.u32 %v369, 7
        %v371 = vsub.s32 %v368, %v370
        %v372 = vrot.slane %v364, %v371
        %v374 = vunpack.c.l.s4 1934713408
        %v375 = vunpack.c.0.s8 %v374
        %v376 = vlaneseq
        %v377 = vshrl.u32 %v376, 7
        %v378 = vsub.s32 %v375, %v377
        %v379 = vrot.slane %v365, %v378
        %v380 = vcombine.low %v348, %v363
        %v381 = vcombine.high %v348, %v363
        %v383 = vunpack.c.l.s4 1934713408
        %v384 = vunpack.c.0.s8 %v383
        %v385 = vlaneseq
        %v386 = vshrl.u32 %v385, 7
        %v387 = vsub.s32 %v384, %v386
        %v388 = vrot.slane %v380, %v387
        %v390 = vunpack.c.l.s4 1934713408
        %v391 = vunpack.c.0.s8 %v390
        %v392 = vlaneseq
        %v393 = vshrl.u32 %v392, 7
        %v394 = vsub.s32 %v391, %v393
        %v395 = vrot.slane %v381, %v394
        %v396 = vcombine.high %v372, 0.0
        %v397 = vcombine.high %v379, 0.0
        %v398 = vcombine.high %v388, 0.0
        %v399 = vcombine.high %v395, 0.0
        %v400 = vcombine.high %v222, 0.0
        %v402 = vunpack.c.l.s4 1983009808
        %v403 = vunpack.c.0.s8 %v402
        %v404 = vlaneseq
        %v405 = vshrl.u32 %v404, 7
        %v406 = vsub.s32 %v403, %v405
        %v407 = vrot.slane %v222, %v406
        %v409 = vunpack.c.l.s4 1983009808
        %v410 = vunpack.c.0.s8 %v409
        %v411 = vlaneseq
        %v412 = vshrl.u32 %v411, 7
        %v413 = vsub.s32 %v410, %v412
        %v414 = vrot.slane %v400, %v413
        %v415 = vcombine.high %v254, 0.0
        %v417 = vunpack.c.l.s4 1983009808
        %v418 = vunpack.c.0.s8 %v417
        %v419 = vlaneseq
        %v420 = vshrl.u32 %v419, 7
        %v421 = vsub.s32 %v418, %v420
        %v422 = vrot.slane %v254, %v421
        %v424 = vunpack.c.l.s4 1983009808
        %v425 = vunpack.c.0.s8 %v424
        %v426 = vlaneseq
        %v427 = vshrl.u32 %v426, 7
        %v428 = vsub.s32 %v425, %v427
        %v429 = vrot.slane %v415, %v428
        %v430 = vcombine.low %v407, %v422
        %v431 = vcombine.high %v407, %v422
        %v433 = vunpack.c.l.s4 1934713408
        %v434 = vunpack.c.0.s8 %v433
        %v435 = vlaneseq
        %v436 = vshrl.u32 %v435, 7
        %v437 = vsub.s32 %v434, %v436
        %v438 = vrot.slane %v430, %v437
        %v440 = vunpack.c.l.s4 1934713408
        %v441 = vunpack.c.0.s8 %v440
        %v442 = vlaneseq
        %v443 = vshrl.u32 %v442, 7
        %v444 = vsub.s32 %v441, %v443
        %v445 = vrot.slane %v431, %v444
        %v446 = vcombine.low %v414, %v429
        %v447 = vcombine.high %v414, %v429
        %v449 = vunpack.c.l.s4 1934713408
        %v450 = vunpack.c.0.s8 %v449
        %v451 = vlaneseq
        %v452 = vshrl.u32 %v451, 7
        %v453 = vsub.s32 %v450, %v452
        %v454 = vrot.slane %v446, %v453
        %v456 = vunpack.c.l.s4 1934713408
        %v457 = vunpack.c.0.s8 %v456
        %v458 = vlaneseq
        %v459 = vshrl.u32 %v458, 7
        %v460 = vsub.s32 %v457, %v459
        %v461 = vrot.slane %v447, %v460
        %v462 = vcombine.high %v438, 0.0
        %v463 = vcombine.high %v445, 0.0
        %v464 = vcombine.high %v454, 0.0
        %v465 = vcombine.high %v461, 0.0
        %v466 = vcombine.high %v223, 0.0
        %v468 = vunpack.c.l.s4 1983009808
        %v469 = vunpack.c.0.s8 %v468
        %v470 = vlaneseq
        %v471 = vshrl.u32 %v470, 7
        %v472 = vsub.s32 %v469, %v471
        %v473 = vrot.slane %v223, %v472
        %v475 = vunpack.c.l.s4 1983009808
        %v476 = vunpack.c.0.s8 %v475
        %v477 = vlaneseq
        %v478 = vshrl.u32 %v477, 7
        %v479 = vsub.s32 %v476, %v478
        %v480 = vrot.slane %v466, %v479
        %v481 = vcombine.high %v255, 0.0
        %v483 = vunpack.c.l.s4 1983009808
        %v484 = vunpack.c.0.s8 %v483
        %v485 = vlaneseq
        %v486 = vshrl.u32 %v485, 7
        %v487 = vsub.s32 %v484, %v486
        %v488 = vrot.slane %v255, %v487
        %v490 = vunpack.c.l.s4 1983009808
        %v491 = vunpack.c.0.s8 %v490
        %v492 = vlaneseq
        %v493 = vshrl.u32 %v492, 7
        %v494 = vsub.s32 %v491, %v493
        %v495 = vrot.slane %v481, %v494
        %v496 = vcombine.low %v473, %v488
        %v497 = vcombine.high %v473, %v488
        %v499 = vunpack.c.l.s4 1934713408
        %v500 = vunpack.c.0.s8 %v499
        %v501 = vlaneseq
        %v502 = vshrl.u32 %v501, 7
        %v503 = vsub.s32 %v500, %v502
        %v504 = vrot.slane %v496, %v503
        %v506 = vunpack.c.l.s4 1934713408
        %v507 = vunpack.c.0.s8 %v506
        %v508 = vlaneseq
        %v509 = vshrl.u32 %v508, 7
        %v510 = vsub.s32 %v507, %v509
        %v511 = vrot.slane %v497, %v510
        %v512 = vcombine.low %v480, %v495
        %v513 = vcombine.high %v480, %v495
        %v515 = vunpack.c.l.s4 1934713408
        %v516 = vunpack.c.0.s8 %v515
        %v517 = vlaneseq
        %v518 = vshrl.u32 %v517, 7
        %v519 = vsub.s32 %v516, %v518
        %v520 = vrot.slane %v512, %v519
        %v522 = vunpack.c.l.s4 1934713408
        %v523 = vunpack.c.0.s8 %v522
        %v524 = vlaneseq
        %v525 = vshrl.u32 %v524, 7
        %v526 = vsub.s32 %v523, %v525
        %v527 = vrot.slane %v513, %v526
        %v528 = vcombine.high %v504, 0.0
        %v529 = vcombine.high %v511, 0.0
        %v530 = vcombine.high %v520, 0.0
        %v531 = vcombine.high %v527, 0.0
        %v532 = vcombine.high %v224, 0.0
        %v534 = vunpack.c.l.s4 1983009808
        %v535 = vunpack.c.0.s8 %v534
        %v536 = vlaneseq
        %v537 = vshrl.u32 %v536, 7
        %v538 = vsub.s32 %v535, %v537
        %v539 = vrot.slane %v224, %v538
        %v541 = vunpack.c.l.s4 1983009808
        %v542 = vunpack.c.0.s8 %v541
        %v543 = vlaneseq
        %v544 = vshrl.u32 %v543, 7
        %v545 = vsub.s32 %v542, %v544
        %v546 = vrot.slane %v532, %v545
        %v547 = vcombine.high %v256, 0.0
        %v549 = vunpack.c.l.s4 1983009808
        %v550 = vunpack.c.0.s8 %v549
        %v551 = vlaneseq
        %v552 = vshrl.u32 %v551, 7
        %v553 = vsub.s32 %v550, %v552
        %v554 = vrot.slane %v256, %v553
        %v556 = vunpack.c.l.s4 1983009808
        %v557 = vunpack.c.0.s8 %v556
        %v558 = vlaneseq
        %v559 = vshrl.u32 %v558, 7
        %v560 = vsub.s32 %v557, %v559
        %v561 = vrot.slane %v547, %v560
        %v562 = vcombine.low %v539, %v554
        %v563 = vcombine.high %v539, %v554
        %v565 = vunpack.c.l.s4 1934713408
        %v566 = vunpack.c.0.s8 %v565
        %v567 = vlaneseq
        %v568 = vshrl.u32 %v567, 7
        %v569 = vsub.s32 %v566, %v568
        %v570 = vrot.slane %v562, %v569
        %v572 = vunpack.c.l.s4 1934713408
        %v573 = vunpack.c.0.s8 %v572
        %v574 = vlaneseq
        %v575 = vshrl.u32 %v574, 7
        %v576 = vsub.s32 %v573, %v575
        %v577 = vrot.slane %v563, %v576
        %v578 = vcombine.low %v546, %v561
        %v579 = vcombine.high %v546, %v561
        %v581 = vunpack.c.l.s4 1934713408
        %v582 = vunpack.c.0.s8 %v581
        %v583 = vlaneseq
        %v584 = vshrl.u32 %v583, 7
        %v585 = vsub.s32 %v582, %v584
        %v586 = vrot.slane %v578, %v585
        %v588 = vunpack.c.l.s4 1934713408
        %v589 = vunpack.c.0.s8 %v588
        %v590 = vlaneseq
        %v591 = vshrl.u32 %v590, 7
        %v592 = vsub.s32 %v589, %v591
        %v593 = vrot.slane %v579, %v592
        %v594 = vcombine.high %v570, 0.0
        %v595 = vcombine.high %v577, 0.0
        %v596 = vcombine.high %v586, 0.0
        %v597 = vcombine.high %v593, 0.0
        %v598 = vcombine.high %v225, 0.0
        %v600 = vunpack.c.l.s4 1983009808
        %v601 = vunpack.c.0.s8 %v600
        %v602 = vlaneseq
        %v603 = vshrl.u32 %v602, 7
        %v604 = vsub.s32 %v601, %v603
        %v605 = vrot.slane %v225, %v604
        %v607 = vunpack.c.l.s4 1983009808
        %v608 = vunpack.c.0.s8 %v607
        %v609 = vlaneseq
        %v610 = vshrl.u32 %v609, 7
        %v611 = vsub.s32 %v608, %v610
        %v612 = vrot.slane %v598, %v611
        %v613 = vcombine.high %v257, 0.0
        %v615 = vunpack.c.l.s4 1983009808
        %v616 = vunpack.c.0.s8 %v615
        %v617 = vlaneseq
        %v618 = vshrl.u32 %v617, 7
        %v619 = vsub.s32 %v616, %v618
        %v620 = vrot.slane %v257, %v619
        %v622 = vunpack.c.l.s4 1983009808
        %v623 = vunpack.c.0.s8 %v622
        %v624 = vlaneseq
        %v625 = vshrl.u32 %v624, 7
        %v626 = vsub.s32 %v623, %v625
        %v627 = vrot.slane %v613, %v626
        %v628 = vcombine.low %v605, %v620
        %v629 = vcombine.high %v605, %v620
        %v631 = vunpack.c.l.s4 1934713408
        %v632 = vunpack.c.0.s8 %v631
        %v633 = vlaneseq
        %v634 = vshrl.u32 %v633, 7
        %v635 = vsub.s32 %v632, %v634
        %v636 = vrot.slane %v628, %v635
        %v638 = vunpack.c.l.s4 1934713408
        %v639 = vunpack.c.0.s8 %v638
        %v640 = vlaneseq
        %v641 = vshrl.u32 %v640, 7
        %v642 = vsub.s32 %v639, %v641
        %v643 = vrot.slane %v629, %v642
        %v644 = vcombine.low %v612, %v627
        %v645 = vcombine.high %v612, %v627
        %v647 = vunpack.c.l.s4 1934713408
        %v648 = vunpack.c.0.s8 %v647
        %v649 = vlaneseq
        %v650 = vshrl.u32 %v649, 7
        %v651 = vsub.s32 %v648, %v650
        %v652 = vrot.slane %v644, %v651
        %v654 = vunpack.c.l.s4 1934713408
        %v655 = vunpack.c.0.s8 %v654
        %v656 = vlaneseq
        %v657 = vshrl.u32 %v656, 7
        %v658 = vsub.s32 %v655, %v657
        %v659 = vrot.slane %v645, %v658
        %v660 = vcombine.high %v636, 0.0
        %v661 = vcombine.high %v643, 0.0
        %v662 = vcombine.high %v652, 0.0
        %v663 = vcombine.high %v659, 0.0
        %v664 = vcombine.high %v226, 0.0
        %v666 = vunpack.c.l.s4 1983009808
        %v667 = vunpack.c.0.s8 %v666
        %v668 = vlaneseq
        %v669 = vshrl.u32 %v668, 7
        %v670 = vsub.s32 %v667, %v669
        %v671 = vrot.slane %v226, %v670
        %v673 = vunpack.c.l.s4 1983009808
        %v674 = vunpack.c.0.s8 %v673
        %v675 = vlaneseq
        %v676 = vshrl.u32 %v675, 7
        %v677 = vsub.s32 %v674, %v676
        %v678 = vrot.slane %v664, %v677
        %v679 = vcombine.high %v258, 0.0
        %v681 = vunpack.c.l.s4 1983009808
        %v682 = vunpack.c.0.s8 %v681
        %v683 = vlaneseq
        %v684 = vshrl.u32 %v683, 7
        %v685 = vsub.s32 %v682, %v684
        %v686 = vrot.slane %v258, %v685
        %v688 = vunpack.c.l.s4 1983009808
        %v689 = vunpack.c.0.s8 %v688
        %v690 = vlaneseq
        %v691 = vshrl.u32 %v690, 7
        %v692 = vsub.s32 %v689, %v691
        %v693 = vrot.slane %v679, %v692
        %v694 = vcombine.low %v671, %v686
        %v695 = vcombine.high %v671, %v686
        %v697 = vunpack.c.l.s4 1934713408
        %v698 = vunpack.c.0.s8 %v697
        %v699 = vlaneseq
        %v700 = vshrl.u32 %v699, 7
        %v701 = vsub.s32 %v698, %v700
        %v702 = vrot.slane %v694, %v701
        %v704 = vunpack.c.l.s4 1934713408
        %v705 = vunpack.c.0.s8 %v704
        %v706 = vlaneseq
        %v707 = vshrl.u32 %v706, 7
        %v708 = vsub.s32 %v705, %v707
        %v709 = vrot.slane %v695, %v708
        %v710 = vcombine.low %v678, %v693
        %v711 = vcombine.high %v678, %v693
        %v713 = vunpack.c.l.s4 1934713408
        %v714 = vunpack.c.0.s8 %v713
        %v715 = vlaneseq
        %v716 = vshrl.u32 %v715, 7
        %v717 = vsub.s32 %v714, %v716
        %v718 = vrot.slane %v710, %v717
        %v720 = vunpack.c.l.s4 1934713408
        %v721 = vunpack.c.0.s8 %v720
        %v722 = vlaneseq
        %v723 = vshrl.u32 %v722, 7
        %v724 = vsub.s32 %v721, %v723
        %v725 = vrot.slane %v711, %v724
        %v726 = vcombine.high %v702, 0.0
        %v727 = vcombine.high %v709, 0.0
        %v728 = vcombine.high %v718, 0.0
        %v729 = vcombine.high %v725, 0.0
        %v730 = vcombine.high %v227, 0.0
        %v732 = vunpack.c.l.s4 1983009808
        %v733 = vunpack.c.0.s8 %v732
        %v734 = vlaneseq
        %v735 = vshrl.u32 %v734, 7
        %v736 = vsub.s32 %v733, %v735
        %v737 = vrot.slane %v227, %v736
        %v739 = vunpack.c.l.s4 1983009808
        %v740 = vunpack.c.0.s8 %v739
        %v741 = vlaneseq
        %v742 = vshrl.u32 %v741, 7
        %v743 = vsub.s32 %v740, %v742
        %v744 = vrot.slane %v730, %v743
        %v745 = vcombine.high %v259, 0.0
        %v747 = vunpack.c.l.s4 1983009808
        %v748 = vunpack.c.0.s8 %v747
        %v749 = vlaneseq
        %v750 = vshrl.u32 %v749, 7
        %v751 = vsub.s32 %v748, %v750
        %v752 = vrot.slane %v259, %v751
        %v754 = vunpack.c.l.s4 1983009808
        %v755 = vunpack.c.0.s8 %v754
        %v756 = vlaneseq
        %v757 = vshrl.u32 %v756, 7
        %v758 = vsub.s32 %v755, %v757
        %v759 = vrot.slane %v745, %v758
        %v760 = vcombine.low %v737, %v752
        %v761 = vcombine.high %v737, %v752
        %v763 = vunpack.c.l.s4 1934713408
        %v764 = vunpack.c.0.s8 %v763
        %v765 = vlaneseq
        %v766 = vshrl.u32 %v765, 7
        %v767 = vsub.s32 %v764, %v766
        %v768 = vrot.slane %v760, %v767
        %v770 = vunpack.c.l.s4 1934713408
        %v771 = vunpack.c.0.s8 %v770
        %v772 = vlaneseq
        %v773 = vshrl.u32 %v772, 7
        %v774 = vsub.s32 %v771, %v773
        %v775 = vrot.slane %v761, %v774
        %v776 = vcombine.low %v744, %v759
        %v777 = vcombine.high %v744, %v759
        %v779 = vunpack.c.l.s4 1934713408
        %v780 = vunpack.c.0.s8 %v779
        %v781 = vlaneseq
        %v782 = vshrl.u32 %v781, 7
        %v783 = vsub.s32 %v780, %v782
        %v784 = vrot.slane %v776, %v783
        %v786 = vunpack.c.l.s4 1934713408
        %v787 = vunpack.c.0.s8 %v786
        %v788 = vlaneseq
        %v789 = vshrl.u32 %v788, 7
        %v790 = vsub.s32 %v787, %v789
        %v791 = vrot.slane %v777, %v790
        %v792 = vcombine.high %v768, 0.0
        %v793 = vcombine.high %v775, 0.0
        %v794 = vcombine.high %v784, 0.0
        %v795 = vcombine.high %v791, 0.0
        %v796 = vcombine.high %v228, 0.0
        %v798 = vunpack.c.l.s4 1983009808
        %v799 = vunpack.c.0.s8 %v798
        %v800 = vlaneseq
        %v801 = vshrl.u32 %v800, 7
        %v802 = vsub.s32 %v799, %v801
        %v803 = vrot.slane %v228, %v802
        %v805 = vunpack.c.l.s4 1983009808
        %v806 = vunpack.c.0.s8 %v805
        %v807 = vlaneseq
        %v808 = vshrl.u32 %v807, 7
        %v809 = vsub.s32 %v806, %v808
        %v810 = vrot.slane %v796, %v809
        %v811 = vcombine.high %v260, 0.0
        %v813 = vunpack.c.l.s4 1983009808
        %v814 = vunpack.c.0.s8 %v813
        %v815 = vlaneseq
        %v816 = vshrl.u32 %v815, 7
        %v817 = vsub.s32 %v814, %v816
        %v818 = vrot.slane %v260, %v817
        %v820 = vunpack.c.l.s4 1983009808
        %v821 = vunpack.c.0.s8 %v820
        %v822 = vlaneseq
        %v823 = vshrl.u32 %v822, 7
        %v824 = vsub.s32 %v821, %v823
        %v825 = vrot.slane %v811, %v824
        %v826 = vcombine.low %v803, %v818
        %v827 = vcombine.high %v803, %v818
        %v829 = vunpack.c.l.s4 1934713408
        %v830 = vunpack.c.0.s8 %v829
        %v831 = vlaneseq
        %v832 = vshrl.u32 %v831, 7
        %v833 = vsub.s32 %v830, %v832
        %v834 = vrot.slane %v826, %v833
        %v836 = vunpack.c.l.s4 1934713408
        %v837 = vunpack.c.0.s8 %v836
        %v838 = vlaneseq
        %v839 = vshrl.u32 %v838, 7
        %v840 = vsub.s32 %v837, %v839
        %v841 = vrot.slane %v827, %v840
        %v842 = vcombine.low %v810, %v825
        %v843 = vcombine.high %v810, %v825
        %v845 = vunpack.c.l.s4 1934713408
        %v846 = vunpack.c.0.s8 %v845
        %v847 = vlaneseq
        %v848 = vshrl.u32 %v847, 7
        %v849 = vsub.s32 %v846, %v848
        %v850 = vrot.slane %v842, %v849
        %v852 = vunpack.c.l.s4 1934713408
        %v853 = vunpack.c.0.s8 %v852
        %v854 = vlaneseq
        %v855 = vshrl.u32 %v854, 7
        %v856 = vsub.s32 %v853, %v855
        %v857 = vrot.slane %v843, %v856
        %v858 = vcombine.high %v834, 0.0
        %v859 = vcombine.high %v841, 0.0
        %v860 = vcombine.high %v850, 0.0
        %v861 = vcombine.high %v857, 0.0
        %v862 = vcombine.high %v229, 0.0
        %v864 = vunpack.c.l.s4 1983009808
        %v865 = vunpack.c.0.s8 %v864
        %v866 = vlaneseq
        %v867 = vshrl.u32 %v866, 7
        %v868 = vsub.s32 %v865, %v867
        %v869 = vrot.slane %v229, %v868
        %v871 = vunpack.c.l.s4 1983009808
        %v872 = vunpack.c.0.s8 %v871
        %v873 = vlaneseq
        %v874 = vshrl.u32 %v873, 7
        %v875 = vsub.s32 %v872, %v874
        %v876 = vrot.slane %v862, %v875
        %v877 = vcombine.high %v261, 0.0
        %v879 = vunpack.c.l.s4 1983009808
        %v880 = vunpack.c.0.s8 %v879
        %v881 = vlaneseq
        %v882 = vshrl.u32 %v881, 7
        %v883 = vsub.s32 %v880, %v882
        %v884 = vrot.slane %v261, %v883
        %v886 = vunpack.c.l.s4 1983009808
        %v887 = vunpack.c.0.s8 %v886
        %v888 = vlaneseq
        %v889 = vshrl.u32 %v888, 7
        %v890 = vsub.s32 %v887, %v889
        %v891 = vrot.slane %v877, %v890
        %v892 = vcombine.low %v869, %v884
        %v893 = vcombine.high %v869, %v884
        %v895 = vunpack.c.l.s4 1934713408
        %v896 = vunpack.c.0.s8 %v895
        %v897 = vlaneseq
        %v898 = vshrl.u32 %v897, 7
        %v899 = vsub.s32 %v896, %v898
        %v900 = vrot.slane %v892, %v899
        %v902 = vunpack.c.l.s4 1934713408
        %v903 = vunpack.c.0.s8 %v902
        %v904 = vlaneseq
        %v905 = vshrl.u32 %v904, 7
        %v906 = vsub.s32 %v903, %v905
        %v907 = vrot.slane %v893, %v906
        %v908 = vcombine.low %v876, %v891
        %v909 = vcombine.high %v876, %v891
        %v911 = vunpack.c.l.s4 1934713408
        %v912 = vunpack.c.0.s8 %v911
        %v913 = vlaneseq
        %v914 = vshrl.u32 %v913, 7
        %v915 = vsub.s32 %v912, %v914
        %v916 = vrot.slane %v908, %v915
        %v918 = vunpack.c.l.s4 1934713408
        %v919 = vunpack.c.0.s8 %v918
        %v920 = vlaneseq
        %v921 = vshrl.u32 %v920, 7
        %v922 = vsub.s32 %v919, %v921
        %v923 = vrot.slane %v909, %v922
        %v924 = vcombine.high %v900, 0.0
        %v925 = vcombine.high %v907, 0.0
        %v926 = vcombine.high %v916, 0.0
        %v927 = vcombine.high %v923, 0.0
        %v928 = vcombine.high %v230, 0.0
        %v930 = vunpack.c.l.s4 1983009808
        %v931 = vunpack.c.0.s8 %v930
        %v932 = vlaneseq
        %v933 = vshrl.u32 %v932, 7
        %v934 = vsub.s32 %v931, %v933
        %v935 = vrot.slane %v230, %v934
        %v937 = vunpack.c.l.s4 1983009808
        %v938 = vunpack.c.0.s8 %v937
        %v939 = vlaneseq
        %v940 = vshrl.u32 %v939, 7
        %v941 = vsub.s32 %v938, %v940
        %v942 = vrot.slane %v928, %v941
        %v943 = vcombine.high %v262, 0.0
        %v945 = vunpack.c.l.s4 1983009808
        %v946 = vunpack.c.0.s8 %v945
        %v947 = vlaneseq
        %v948 = vshrl.u32 %v947, 7
        %v949 = vsub.s32 %v946, %v948
        %v950 = vrot.slane %v262, %v949
        %v952 = vunpack.c.l.s4 1983009808
        %v953 = vunpack.c.0.s8 %v952
        %v954 = vlaneseq
        %v955 = vshrl.u32 %v954, 7
        %v956 = vsub.s32 %v953, %v955
        %v957 = vrot.slane %v943, %v956
        %v958 = vcombine.low %v935, %v950
        %v959 = vcombine.high %v935, %v950
        %v961 = vunpack.c.l.s4 1934713408
        %v962 = vunpack.c.0.s8 %v961
        %v963 = vlaneseq
        %v964 = vshrl.u32 %v963, 7
        %v965 = vsub.s32 %v962, %v964
        %v966 = vrot.slane %v958, %v965
        %v968 = vunpack.c.l.s4 1934713408
        %v969 = vunpack.c.0.s8 %v968
        %v970 = vlaneseq
        %v971 = vshrl.u32 %v970, 7
        %v972 = vsub.s32 %v969, %v971
        %v973 = vrot.slane %v959, %v972
        %v974 = vcombine.low %v942, %v957
        %v975 = vcombine.high %v942, %v957
        %v977 = vunpack.c.l.s4 1934713408
        %v978 = vunpack.c.0.s8 %v977
        %v979 = vlaneseq
        %v980 = vshrl.u32 %v979, 7
        %v981 = vsub.s32 %v978, %v980
        %v982 = vrot.slane %v974, %v981
        %v984 = vunpack.c.l.s4 1934713408
        %v985 = vunpack.c.0.s8 %v984
        %v986 = vlaneseq
        %v987 = vshrl.u32 %v986, 7
        %v988 = vsub.s32 %v985, %v987
        %v989 = vrot.slane %v975, %v988
        %v990 = vcombine.high %v966, 0.0
        %v991 = vcombine.high %v973, 0.0
        %v992 = vcombine.high %v982, 0.0
        %v993 = vcombine.high %v989, 0.0
        %v994 = vcombine.high %v231, 0.0
        %v996 = vunpack.c.l.s4 1983009808
        %v997 = vunpack.c.0.s8 %v996
        %v998 = vlaneseq
        %v999 = vshrl.u32 %v998, 7
        %v1000 = vsub.s32 %v997, %v999
        %v1001 = vrot.slane %v231, %v1000
        %v1003 = vunpack.c.l.s4 1983009808
        %v1004 = vunpack.c.0.s8 %v1003
        %v1005 = vlaneseq
        %v1006 = vshrl.u32 %v1005, 7
        %v1007 = vsub.s32 %v1004, %v1006
        %v1008 = vrot.slane %v994, %v1007
        %v1009 = vcombine.high %v263, 0.0
        %v1011 = vunpack.c.l.s4 1983009808
        %v1012 = vunpack.c.0.s8 %v1011
        %v1013 = vlaneseq
        %v1014 = vshrl.u32 %v1013, 7
        %v1015 = vsub.s32 %v1012, %v1014
        %v1016 = vrot.slane %v263, %v1015
        %v1018 = vunpack.c.l.s4 1983009808
        %v1019 = vunpack.c.0.s8 %v1018
        %v1020 = vlaneseq
        %v1021 = vshrl.u32 %v1020, 7
        %v1022 = vsub.s32 %v1019, %v1021
        %v1023 = vrot.slane %v1009, %v1022
        %v1024 = vcombine.low %v1001, %v1016
        %v1025 = vcombine.high %v1001, %v1016
        %v1027 = vunpack.c.l.s4 1934713408
        %v1028 = vunpack.c.0.s8 %v1027
        %v1029 = vlaneseq
        %v1030 = vshrl.u32 %v1029, 7
        %v1031 = vsub.s32 %v1028, %v1030
        %v1032 = vrot.slane %v1024, %v1031
        %v1034 = vunpack.c.l.s4 1934713408
        %v1035 = vunpack.c.0.s8 %v1034
        %v1036 = vlaneseq
        %v1037 = vshrl.u32 %v1036, 7
        %v1038 = vsub.s32 %v1035, %v1037
        %v1039 = vrot.slane %v1025, %v1038
        %v1040 = vcombine.low %v1008, %v1023
        %v1041 = vcombine.high %v1008, %v1023
        %v1043 = vunpack.c.l.s4 1934713408
        %v1044 = vunpack.c.0.s8 %v1043
        %v1045 = vlaneseq
        %v1046 = vshrl.u32 %v1045, 7
        %v1047 = vsub.s32 %v1044, %v1046
        %v1048 = vrot.slane %v1040, %v1047
        %v1050 = vunpack.c.l.s4 1934713408
        %v1051 = vunpack.c.0.s8 %v1050
        %v1052 = vlaneseq
        %v1053 = vshrl.u32 %v1052, 7
        %v1054 = vsub.s32 %v1051, %v1053
        %v1055 = vrot.slane %v1041, %v1054
        %v1056 = vcombine.high %v1032, 0.0
        %v1057 = vcombine.high %v1039, 0.0
        %v1058 = vcombine.high %v1048, 0.0
        %v1059 = vcombine.high %v1055, 0.0
        %v1060 = vcombine.high %v232, 0.0
        %v1062 = vunpack.c.l.s4 1983009808
        %v1063 = vunpack.c.0.s8 %v1062
        %v1064 = vlaneseq
        %v1065 = vshrl.u32 %v1064, 7
        %v1066 = vsub.s32 %v1063, %v1065
        %v1067 = vrot.slane %v232, %v1066
        %v1069 = vunpack.c.l.s4 1983009808
        %v1070 = vunpack.c.0.s8 %v1069
        %v1071 = vlaneseq
        %v1072 = vshrl.u32 %v1071, 7
        %v1073 = vsub.s32 %v1070, %v1072
        %v1074 = vrot.slane %v1060, %v1073
        %v1075 = vcombine.high %v264, 0.0
        %v1077 = vunpack.c.l.s4 1983009808
        %v1078 = vunpack.c.0.s8 %v1077
        %v1079 = vlaneseq
        %v1080 = vshrl.u32 %v1079, 7
        %v1081 = vsub.s32 %v1078, %v1080
        %v1082 = vrot.slane %v264, %v1081
        %v1084 = vunpack.c.l.s4 1983009808
        %v1085 = vunpack.c.0.s8 %v1084
        %v1086 = vlaneseq
        %v1087 = vshrl.u32 %v1086, 7
        %v1088 = vsub.s32 %v1085, %v1087
        %v1089 = vrot.slane %v1075, %v1088
        %v1090 = vcombine.low %v1067, %v1082
        %v1091 = vcombine.high %v1067, %v1082
        %v1093 = vunpack.c.l.s4 1934713408
        %v1094 = vunpack.c.0.s8 %v1093
        %v1095 = vlaneseq
        %v1096 = vshrl.u32 %v1095, 7
        %v1097 = vsub.s32 %v1094, %v1096
        %v1098 = vrot.slane %v1090, %v1097
        %v1100 = vunpack.c.l.s4 1934713408
        %v1101 = vunpack.c.0.s8 %v1100
        %v1102 = vlaneseq
        %v1103 = vshrl.u32 %v1102, 7
        %v1104 = vsub.s32 %v1101, %v1103
        %v1105 = vrot.slane %v1091, %v1104
        %v1106 = vcombine.low %v1074, %v1089
        %v1107 = vcombine.high %v1074, %v1089
        %v1109 = vunpack.c.l.s4 1934713408
        %v1110 = vunpack.c.0.s8 %v1109
        %v1111 = vlaneseq
        %v1112 = vshrl.u32 %v1111, 7
        %v1113 = vsub.s32 %v1110, %v1112
        %v1114 = vrot.slane %v1106, %v1113
        %v1116 = vunpack.c.l.s4 1934713408
        %v1117 = vunpack.c.0.s8 %v1116
        %v1118 = vlaneseq
        %v1119 = vshrl.u32 %v1118, 7
        %v1120 = vsub.s32 %v1117, %v1119
        %v1121 = vrot.slane %v1107, %v1120
        %v1122 = vcombine.high %v1098, 0.0
        %v1123 = vcombine.high %v1105, 0.0
        %v1124 = vcombine.high %v1114, 0.0
        %v1125 = vcombine.high %v1121, 0.0
        %v1126 = vcombine.high %v233, 0.0
        %v1128 = vunpack.c.l.s4 1983009808
        %v1129 = vunpack.c.0.s8 %v1128
        %v1130 = vlaneseq
        %v1131 = vshrl.u32 %v1130, 7
        %v1132 = vsub.s32 %v1129, %v1131
        %v1133 = vrot.slane %v233, %v1132
        %v1135 = vunpack.c.l.s4 1983009808
        %v1136 = vunpack.c.0.s8 %v1135
        %v1137 = vlaneseq
        %v1138 = vshrl.u32 %v1137, 7
        %v1139 = vsub.s32 %v1136, %v1138
        %v1140 = vrot.slane %v1126, %v1139
        %v1141 = vcombine.high %v265, 0.0
        %v1143 = vunpack.c.l.s4 1983009808
        %v1144 = vunpack.c.0.s8 %v1143
        %v1145 = vlaneseq
        %v1146 = vshrl.u32 %v1145, 7
        %v1147 = vsub.s32 %v1144, %v1146
        %v1148 = vrot.slane %v265, %v1147
        %v1150 = vunpack.c.l.s4 1983009808
        %v1151 = vunpack.c.0.s8 %v1150
        %v1152 = vlaneseq
        %v1153 = vshrl.u32 %v1152, 7
        %v1154 = vsub.s32 %v1151, %v1153
        %v1155 = vrot.slane %v1141, %v1154
        %v1156 = vcombine.low %v1133, %v1148
        %v1157 = vcombine.high %v1133, %v1148
        %v1159 = vunpack.c.l.s4 1934713408
        %v1160 = vunpack.c.0.s8 %v1159
        %v1161 = vlaneseq
        %v1162 = vshrl.u32 %v1161, 7
        %v1163 = vsub.s32 %v1160, %v1162
        %v1164 = vrot.slane %v1156, %v1163
        %v1166 = vunpack.c.l.s4 1934713408
        %v1167 = vunpack.c.0.s8 %v1166
        %v1168 = vlaneseq
        %v1169 = vshrl.u32 %v1168, 7
        %v1170 = vsub.s32 %v1167, %v1169
        %v1171 = vrot.slane %v1157, %v1170
        %v1172 = vcombine.low %v1140, %v1155
        %v1173 = vcombine.high %v1140, %v1155
        %v1175 = vunpack.c.l.s4 1934713408
        %v1176 = vunpack.c.0.s8 %v1175
        %v1177 = vlaneseq
        %v1178 = vshrl.u32 %v1177, 7
        %v1179 = vsub.s32 %v1176, %v1178
        %v1180 = vrot.slane %v1172, %v1179
        %v1182 = vunpack.c.l.s4 1934713408
        %v1183 = vunpack.c.0.s8 %v1182
        %v1184 = vlaneseq
        %v1185 = vshrl.u32 %v1184, 7
        %v1186 = vsub.s32 %v1183, %v1185
        %v1187 = vrot.slane %v1173, %v1186
        %v1188 = vcombine.high %v1164, 0.0
        %v1189 = vcombine.high %v1171, 0.0
        %v1190 = vcombine.high %v1180, 0.0
        %v1191 = vcombine.high %v1187, 0.0
        %v1192 = vcombine.high %v234, 0.0
        %v1194 = vunpack.c.l.s4 1983009808
        %v1195 = vunpack.c.0.s8 %v1194
        %v1196 = vlaneseq
        %v1197 = vshrl.u32 %v1196, 7
        %v1198 = vsub.s32 %v1195, %v1197
        %v1199 = vrot.slane %v234, %v1198
        %v1201 = vunpack.c.l.s4 1983009808
        %v1202 = vunpack.c.0.s8 %v1201
        %v1203 = vlaneseq
        %v1204 = vshrl.u32 %v1203, 7
        %v1205 = vsub.s32 %v1202, %v1204
        %v1206 = vrot.slane %v1192, %v1205
        %v1207 = vcombine.high %v266, 0.0
        %v1209 = vunpack.c.l.s4 1983009808
        %v1210 = vunpack.c.0.s8 %v1209
        %v1211 = vlaneseq
        %v1212 = vshrl.u32 %v1211, 7
        %v1213 = vsub.s32 %v1210, %v1212
        %v1214 = vrot.slane %v266, %v1213
        %v1216 = vunpack.c.l.s4 1983009808
        %v1217 = vunpack.c.0.s8 %v1216
        %v1218 = vlaneseq
        %v1219 = vshrl.u32 %v1218, 7
        %v1220 = vsub.s32 %v1217, %v1219
        %v1221 = vrot.slane %v1207, %v1220
        %v1222 = vcombine.low %v1199, %v1214
        %v1223 = vcombine.high %v1199, %v1214
        %v1225 = vunpack.c.l.s4 1934713408
        %v1226 = vunpack.c.0.s8 %v1225
        %v1227 = vlaneseq
        %v1228 = vshrl.u32 %v1227, 7
        %v1229 = vsub.s32 %v1226, %v1228
        %v1230 = vrot.slane %v1222, %v1229
        %v1232 = vunpack.c.l.s4 1934713408
        %v1233 = vunpack.c.0.s8 %v1232
        %v1234 = vlaneseq
        %v1235 = vshrl.u32 %v1234, 7
        %v1236 = vsub.s32 %v1233, %v1235
        %v1237 = vrot.slane %v1223, %v1236
        %v1238 = vcombine.low %v1206, %v1221
        %v1239 = vcombine.high %v1206, %v1221
        %v1241 = vunpack.c.l.s4 1934713408
        %v1242 = vunpack.c.0.s8 %v1241
        %v1243 = vlaneseq
        %v1244 = vshrl.u32 %v1243, 7
        %v1245 = vsub.s32 %v1242, %v1244
        %v1246 = vrot.slane %v1238, %v1245
        %v1248 = vunpack.c.l.s4 1934713408
        %v1249 = vunpack.c.0.s8 %v1248
        %v1250 = vlaneseq
        %v1251 = vshrl.u32 %v1250, 7
        %v1252 = vsub.s32 %v1249, %v1251
        %v1253 = vrot.slane %v1239, %v1252
        %v1254 = vcombine.high %v1230, 0.0
        %v1255 = vcombine.high %v1237, 0.0
        %v1256 = vcombine.high %v1246, 0.0
        %v1257 = vcombine.high %v1253, 0.0
        %v1258 = vcombine.high %v235, 0.0
        %v1260 = vunpack.c.l.s4 1983009808
        %v1261 = vunpack.c.0.s8 %v1260
        %v1262 = vlaneseq
        %v1263 = vshrl.u32 %v1262, 7
        %v1264 = vsub.s32 %v1261, %v1263
        %v1265 = vrot.slane %v235, %v1264
        %v1267 = vunpack.c.l.s4 1983009808
        %v1268 = vunpack.c.0.s8 %v1267
        %v1269 = vlaneseq
        %v1270 = vshrl.u32 %v1269, 7
        %v1271 = vsub.s32 %v1268, %v1270
        %v1272 = vrot.slane %v1258, %v1271
        %v1273 = vcombine.high %v267, 0.0
        %v1275 = vunpack.c.l.s4 1983009808
        %v1276 = vunpack.c.0.s8 %v1275
        %v1277 = vlaneseq
        %v1278 = vshrl.u32 %v1277, 7
        %v1279 = vsub.s32 %v1276, %v1278
        %v1280 = vrot.slane %v267, %v1279
        %v1282 = vunpack.c.l.s4 1983009808
        %v1283 = vunpack.c.0.s8 %v1282
        %v1284 = vlaneseq
        %v1285 = vshrl.u32 %v1284, 7
        %v1286 = vsub.s32 %v1283, %v1285
        %v1287 = vrot.slane %v1273, %v1286
        %v1288 = vcombine.low %v1265, %v1280
        %v1289 = vcombine.high %v1265, %v1280
        %v1291 = vunpack.c.l.s4 1934713408
        %v1292 = vunpack.c.0.s8 %v1291
        %v1293 = vlaneseq
        %v1294 = vshrl.u32 %v1293, 7
        %v1295 = vsub.s32 %v1292, %v1294
        %v1296 = vrot.slane %v1288, %v1295
        %v1298 = vunpack.c.l.s4 1934713408
        %v1299 = vunpack.c.0.s8 %v1298
        %v1300 = vlaneseq
        %v1301 = vshrl.u32 %v1300, 7
        %v1302 = vsub.s32 %v1299, %v1301
        %v1303 = vrot.slane %v1289, %v1302
        %v1304 = vcombine.low %v1272, %v1287
        %v1305 = vcombine.high %v1272, %v1287
        %v1307 = vunpack.c.l.s4 1934713408
        %v1308 = vunpack.c.0.s8 %v1307
        %v1309 = vlaneseq
        %v1310 = vshrl.u32 %v1309, 7
        %v1311 = vsub.s32 %v1308, %v1310
        %v1312 = vrot.slane %v1304, %v1311
        %v1314 = vunpack.c.l.s4 1934713408
        %v1315 = vunpack.c.0.s8 %v1314
        %v1316 = vlaneseq
        %v1317 = vshrl.u32 %v1316, 7
        %v1318 = vsub.s32 %v1315, %v1317
        %v1319 = vrot.slane %v1305, %v1318
        %v1320 = vcombine.high %v1296, 0.0
        %v1321 = vcombine.high %v1303, 0.0
        %v1322 = vcombine.high %v1312, 0.0
        %v1323 = vcombine.high %v1319, 0.0
        %1325 = vrot.lane.b32.xlu0 %v330, 8
        %v1326 = vpop.permute.xlu0 %1325
        %1329 = vrot.lane.b32.xlu0 %v313, 16
        %v1330 = vpop.permute.xlu0 %1329
        %1333 = vrot.lane.b32.xlu0 %v331, 24
        %v1334 = vpop.permute.xlu0 %1333
        %1337 = vrot.lane.b32.xlu0 %v322, 32
        %v1338 = vpop.permute.xlu0 %1337
        %1341 = vrot.lane.b32.xlu0 %v332, 40
        %v1342 = vpop.permute.xlu0 %1341
        %1345 = vrot.lane.b32.xlu0 %v329, 48
        %v1346 = vpop.permute.xlu0 %1345
        %1349 = vrot.lane.b32.xlu0 %v333, 56
        %v1350 = vpop.permute.xlu0 %1349
        %1353 = vrot.lane.b32.xlu0 %v372, 64
        %v1354 = vpop.permute.xlu0 %1353
        %1357 = vrot.lane.b32.xlu0 %v396, 72
        %v1358 = vpop.permute.xlu0 %1357
        %1361 = vrot.lane.b32.xlu0 %v379, 80
        %v1362 = vpop.permute.xlu0 %1361
        %1365 = vrot.lane.b32.xlu0 %v397, 88
        %v1366 = vpop.permute.xlu0 %1365
        %1369 = vrot.lane.b32.xlu0 %v388, 96
        %v1370 = vpop.permute.xlu0 %1369
        %1373 = vrot.lane.b32.xlu0 %v398, 104
        %v1374 = vpop.permute.xlu0 %1373
        %1377 = vrot.lane.b32.xlu0 %v395, 112
        %v1378 = vpop.permute.xlu0 %1377
        %1381 = vrot.lane.b32.xlu0 %v399, 120
        %v1382 = vpop.permute.xlu0 %1381
        %1385 = vrot.lane.b32.xlu0 %v462, 8
        %v1386 = vpop.permute.xlu0 %1385
        %1389 = vrot.lane.b32.xlu0 %v445, 16
        %v1390 = vpop.permute.xlu0 %1389
        %1393 = vrot.lane.b32.xlu0 %v463, 24
        %v1394 = vpop.permute.xlu0 %1393
        %1397 = vrot.lane.b32.xlu0 %v454, 32
        %v1398 = vpop.permute.xlu0 %1397
        %1401 = vrot.lane.b32.xlu0 %v464, 40
        %v1402 = vpop.permute.xlu0 %1401
        %1405 = vrot.lane.b32.xlu0 %v461, 48
        %v1406 = vpop.permute.xlu0 %1405
        %1409 = vrot.lane.b32.xlu0 %v465, 56
        %v1410 = vpop.permute.xlu0 %1409
        %1413 = vrot.lane.b32.xlu0 %v504, 64
        %v1414 = vpop.permute.xlu0 %1413
        %1417 = vrot.lane.b32.xlu0 %v528, 72
        %v1418 = vpop.permute.xlu0 %1417
        %1421 = vrot.lane.b32.xlu0 %v511, 80
        %v1422 = vpop.permute.xlu0 %1421
        %1425 = vrot.lane.b32.xlu0 %v529, 88
        %v1426 = vpop.permute.xlu0 %1425
        %1429 = vrot.lane.b32.xlu0 %v520, 96
        %v1430 = vpop.permute.xlu0 %1429
        %1433 = vrot.lane.b32.xlu0 %v530, 104
        %v1434 = vpop.permute.xlu0 %1433
        %1437 = vrot.lane.b32.xlu0 %v527, 112
        %v1438 = vpop.permute.xlu0 %1437
        %1441 = vrot.lane.b32.xlu0 %v531, 120
        %v1442 = vpop.permute.xlu0 %1441
        %1445 = vrot.lane.b32.xlu0 %v594, 8
        %v1446 = vpop.permute.xlu0 %1445
        %1449 = vrot.lane.b32.xlu0 %v577, 16
        %v1450 = vpop.permute.xlu0 %1449
        %1453 = vrot.lane.b32.xlu0 %v595, 24
        %v1454 = vpop.permute.xlu0 %1453
        %1457 = vrot.lane.b32.xlu0 %v586, 32
        %v1458 = vpop.permute.xlu0 %1457
        %1461 = vrot.lane.b32.xlu0 %v596, 40
        %v1462 = vpop.permute.xlu0 %1461
        %1465 = vrot.lane.b32.xlu0 %v593, 48
        %v1466 = vpop.permute.xlu0 %1465
        %1469 = vrot.lane.b32.xlu0 %v597, 56
        %v1470 = vpop.permute.xlu0 %1469
        %1473 = vrot.lane.b32.xlu0 %v636, 64
        %v1474 = vpop.permute.xlu0 %1473
        %1477 = vrot.lane.b32.xlu0 %v660, 72
        %v1478 = vpop.permute.xlu0 %1477
        %1481 = vrot.lane.b32.xlu0 %v643, 80
        %v1482 = vpop.permute.xlu0 %1481
        %1485 = vrot.lane.b32.xlu0 %v661, 88
        %v1486 = vpop.permute.xlu0 %1485
        %1489 = vrot.lane.b32.xlu0 %v652, 96
        %v1490 = vpop.permute.xlu0 %1489
        %1493 = vrot.lane.b32.xlu0 %v662, 104
        %v1494 = vpop.permute.xlu0 %1493
        %1497 = vrot.lane.b32.xlu0 %v659, 112
        %v1498 = vpop.permute.xlu0 %1497
        %1501 = vrot.lane.b32.xlu0 %v663, 120
        %v1502 = vpop.permute.xlu0 %1501
        %1505 = vrot.lane.b32.xlu0 %v726, 8
        %v1506 = vpop.permute.xlu0 %1505
        %1509 = vrot.lane.b32.xlu0 %v709, 16
        %v1510 = vpop.permute.xlu0 %1509
        %1513 = vrot.lane.b32.xlu0 %v727, 24
        %v1514 = vpop.permute.xlu0 %1513
        %1517 = vrot.lane.b32.xlu0 %v718, 32
        %v1518 = vpop.permute.xlu0 %1517
        %1521 = vrot.lane.b32.xlu0 %v728, 40
        %v1522 = vpop.permute.xlu0 %1521
        %1525 = vrot.lane.b32.xlu0 %v725, 48
        %v1526 = vpop.permute.xlu0 %1525
        %1529 = vrot.lane.b32.xlu0 %v729, 56
        %v1530 = vpop.permute.xlu0 %1529
        %1533 = vrot.lane.b32.xlu0 %v768, 64
        %v1534 = vpop.permute.xlu0 %1533
        %1537 = vrot.lane.b32.xlu0 %v792, 72
        %v1538 = vpop.permute.xlu0 %1537
        %1541 = vrot.lane.b32.xlu0 %v775, 80
        %v1542 = vpop.permute.xlu0 %1541
        %1545 = vrot.lane.b32.xlu0 %v793, 88
        %v1546 = vpop.permute.xlu0 %1545
        %1549 = vrot.lane.b32.xlu0 %v784, 96
        %v1550 = vpop.permute.xlu0 %1549
        %1553 = vrot.lane.b32.xlu0 %v794, 104
        %v1554 = vpop.permute.xlu0 %1553
        %1557 = vrot.lane.b32.xlu0 %v791, 112
        %v1558 = vpop.permute.xlu0 %1557
        %1561 = vrot.lane.b32.xlu0 %v795, 120
        %v1562 = vpop.permute.xlu0 %1561
        %1565 = vrot.lane.b32.xlu0 %v858, 8
        %v1566 = vpop.permute.xlu0 %1565
        %1569 = vrot.lane.b32.xlu0 %v841, 16
        %v1570 = vpop.permute.xlu0 %1569
        %1573 = vrot.lane.b32.xlu0 %v859, 24
        %v1574 = vpop.permute.xlu0 %1573
        %1577 = vrot.lane.b32.xlu0 %v850, 32
        %v1578 = vpop.permute.xlu0 %1577
        %1581 = vrot.lane.b32.xlu0 %v860, 40
        %v1582 = vpop.permute.xlu0 %1581
        %1585 = vrot.lane.b32.xlu0 %v857, 48
        %v1586 = vpop.permute.xlu0 %1585
        %1589 = vrot.lane.b32.xlu0 %v861, 56
        %v1590 = vpop.permute.xlu0 %1589
        %1593 = vrot.lane.b32.xlu0 %v900, 64
        %v1594 = vpop.permute.xlu0 %1593
        %1597 = vrot.lane.b32.xlu0 %v924, 72
        %v1598 = vpop.permute.xlu0 %1597
        %1601 = vrot.lane.b32.xlu0 %v907, 80
        %v1602 = vpop.permute.xlu0 %1601
        %1605 = vrot.lane.b32.xlu0 %v925, 88
        %v1606 = vpop.permute.xlu0 %1605
        %1609 = vrot.lane.b32.xlu0 %v916, 96
        %v1610 = vpop.permute.xlu0 %1609
        %1613 = vrot.lane.b32.xlu0 %v926, 104
        %v1614 = vpop.permute.xlu0 %1613
        %1617 = vrot.lane.b32.xlu0 %v923, 112
        %v1618 = vpop.permute.xlu0 %1617
        %1621 = vrot.lane.b32.xlu0 %v927, 120
        %v1622 = vpop.permute.xlu0 %1621
        %1625 = vrot.lane.b32.xlu0 %v990, 8
        %v1626 = vpop.permute.xlu0 %1625
        %1629 = vrot.lane.b32.xlu0 %v973, 16
        %v1630 = vpop.permute.xlu0 %1629
        %1633 = vrot.lane.b32.xlu0 %v991, 24
        %v1634 = vpop.permute.xlu0 %1633
        %1637 = vrot.lane.b32.xlu0 %v982, 32
        %v1638 = vpop.permute.xlu0 %1637
        %1641 = vrot.lane.b32.xlu0 %v992, 40
        %v1642 = vpop.permute.xlu0 %1641
        %1645 = vrot.lane.b32.xlu0 %v989, 48
        %v1646 = vpop.permute.xlu0 %1645
        %1649 = vrot.lane.b32.xlu0 %v993, 56
        %v1650 = vpop.permute.xlu0 %1649
        %1653 = vrot.lane.b32.xlu0 %v1032, 64
        %v1654 = vpop.permute.xlu0 %1653
        %1657 = vrot.lane.b32.xlu0 %v1056, 72
        %v1658 = vpop.permute.xlu0 %1657
        %1661 = vrot.lane.b32.xlu0 %v1039, 80
        %v1662 = vpop.permute.xlu0 %1661
        %1665 = vrot.lane.b32.xlu0 %v1057, 88
        %v1666 = vpop.permute.xlu0 %1665
        %1669 = vrot.lane.b32.xlu0 %v1048, 96
        %v1670 = vpop.permute.xlu0 %1669
        %1673 = vrot.lane.b32.xlu0 %v1058, 104
        %v1674 = vpop.permute.xlu0 %1673
        %1677 = vrot.lane.b32.xlu0 %v1055, 112
        %v1678 = vpop.permute.xlu0 %1677
        %1681 = vrot.lane.b32.xlu0 %v1059, 120
        %v1682 = vpop.permute.xlu0 %1681
        %1685 = vrot.lane.b32.xlu0 %v1122, 8
        %v1686 = vpop.permute.xlu0 %1685
        %1689 = vrot.lane.b32.xlu0 %v1105, 16
        %v1690 = vpop.permute.xlu0 %1689
        %1693 = vrot.lane.b32.xlu0 %v1123, 24
        %v1694 = vpop.permute.xlu0 %1693
        %1697 = vrot.lane.b32.xlu0 %v1114, 32
        %v1698 = vpop.permute.xlu0 %1697
        %1701 = vrot.lane.b32.xlu0 %v1124, 40
        %v1702 = vpop.permute.xlu0 %1701
        %1705 = vrot.lane.b32.xlu0 %v1121, 48
        %v1706 = vpop.permute.xlu0 %1705
        %1709 = vrot.lane.b32.xlu0 %v1125, 56
        %v1710 = vpop.permute.xlu0 %1709
        %1713 = vrot.lane.b32.xlu0 %v1164, 64
        %v1714 = vpop.permute.xlu0 %1713
        %1717 = vrot.lane.b32.xlu0 %v1188, 72
        %v1718 = vpop.permute.xlu0 %1717
        %1721 = vrot.lane.b32.xlu0 %v1171, 80
        %v1722 = vpop.permute.xlu0 %1721
        %1725 = vrot.lane.b32.xlu0 %v1189, 88
        %v1726 = vpop.permute.xlu0 %1725
        %1729 = vrot.lane.b32.xlu0 %v1180, 96
        %v1730 = vpop.permute.xlu0 %1729
        %1733 = vrot.lane.b32.xlu0 %v1190, 104
        %v1734 = vpop.permute.xlu0 %1733
        %1737 = vrot.lane.b32.xlu0 %v1187, 112
        %v1738 = vpop.permute.xlu0 %1737
        %1741 = vrot.lane.b32.xlu0 %v1191, 120
        %v1742 = vpop.permute.xlu0 %1741
        %1745 = vrot.lane.b32.xlu0 %v1254, 8
        %v1746 = vpop.permute.xlu0 %1745
        %1749 = vrot.lane.b32.xlu0 %v1237, 16
        %v1750 = vpop.permute.xlu0 %1749
        %1753 = vrot.lane.b32.xlu0 %v1255, 24
        %v1754 = vpop.permute.xlu0 %1753
        %1757 = vrot.lane.b32.xlu0 %v1246, 32
        %v1758 = vpop.permute.xlu0 %1757
        %1761 = vrot.lane.b32.xlu0 %v1256, 40
        %v1762 = vpop.permute.xlu0 %1761
        %1765 = vrot.lane.b32.xlu0 %v1253, 48
        %v1766 = vpop.permute.xlu0 %1765
        %1769 = vrot.lane.b32.xlu0 %v1257, 56
        %v1770 = vpop.permute.xlu0 %1769
        %1773 = vrot.lane.b32.xlu0 %v1296, 64
        %v1774 = vpop.permute.xlu0 %1773
        %1777 = vrot.lane.b32.xlu0 %v1320, 72
        %v1778 = vpop.permute.xlu0 %1777
        %1781 = vrot.lane.b32.xlu0 %v1303, 80
        %v1782 = vpop.permute.xlu0 %1781
        %1785 = vrot.lane.b32.xlu0 %v1321, 88
        %v1786 = vpop.permute.xlu0 %1785
        %1789 = vrot.lane.b32.xlu0 %v1312, 96
        %v1790 = vpop.permute.xlu0 %1789
        %1793 = vrot.lane.b32.xlu0 %v1322, 104
        %v1794 = vpop.permute.xlu0 %1793
        %1797 = vrot.lane.b32.xlu0 %v1319, 112
        %v1798 = vpop.permute.xlu0 %1797
        %1801 = vrot.lane.b32.xlu0 %v1323, 120
        %v1802 = vpop.permute.xlu0 %1801
        %vm1804 = vcmask 64512
        %v1805 = vsel %vm1804, %v306, %v1326
        %vm1806 = vcmask 130048
        %v1807 = vsel %vm1806, %v1805, %v1330
        %vm1808 = vcmask 195584
        %v1809 = vsel %vm1808, %v1807, %v1334
        %vm1810 = vcmask 261120
        %v1811 = vsel %vm1810, %v1809, %v1338
        %vm1812 = vcmask 326656
        %v1813 = vsel %vm1812, %v1811, %v1342
        %vm1814 = vcmask 392192
        %v1815 = vsel %vm1814, %v1813, %v1346
        %vm1816 = vcmask 457728
        %v1817 = vsel %vm1816, %v1815, %v1350
        %vm1818 = vcmask 523264
        %v1819 = vsel %vm1818, %v1817, %v1354
        %vm1820 = vcmask 588800
        %v1821 = vsel %vm1820, %v1819, %v1358
        %vm1822 = vcmask 654336
        %v1823 = vsel %vm1822, %v1821, %v1362
        %vm1824 = vcmask 719872
        %v1825 = vsel %vm1824, %v1823, %v1366
        %vm1826 = vcmask 785408
        %v1827 = vsel %vm1826, %v1825, %v1370
        %vm1828 = vcmask 850944
        %v1829 = vsel %vm1828, %v1827, %v1374
        %vm1830 = vcmask 916480
        %v1831 = vsel %vm1830, %v1829, %v1378
        %vm1832 = vcmask 982016
        %v1833 = vsel %vm1832, %v1831, %v1382
        %v1834 = vsel %vm1804, %v438, %v1386
        %v1835 = vsel %vm1806, %v1834, %v1390
        %v1836 = vsel %vm1808, %v1835, %v1394
        %v1837 = vsel %vm1810, %v1836, %v1398
        %v1838 = vsel %vm1812, %v1837, %v1402
        %v1839 = vsel %vm1814, %v1838, %v1406
        %v1840 = vsel %vm1816, %v1839, %v1410
        %v1841 = vsel %vm1818, %v1840, %v1414
        %v1842 = vsel %vm1820, %v1841, %v1418
        %v1843 = vsel %vm1822, %v1842, %v1422
        %v1844 = vsel %vm1824, %v1843, %v1426
        %v1845 = vsel %vm1826, %v1844, %v1430
        %v1846 = vsel %vm1828, %v1845, %v1434
        %v1847 = vsel %vm1830, %v1846, %v1438
        %v1848 = vsel %vm1832, %v1847, %v1442
        %v1849 = vsel %vm1804, %v570, %v1446
        %v1850 = vsel %vm1806, %v1849, %v1450
        %v1851 = vsel %vm1808, %v1850, %v1454
        %v1852 = vsel %vm1810, %v1851, %v1458
        %v1853 = vsel %vm1812, %v1852, %v1462
        %v1854 = vsel %vm1814, %v1853, %v1466
        %v1855 = vsel %vm1816, %v1854, %v1470
        %v1856 = vsel %vm1818, %v1855, %v1474
        %v1857 = vsel %vm1820, %v1856, %v1478
        %v1858 = vsel %vm1822, %v1857, %v1482
        %v1859 = vsel %vm1824, %v1858, %v1486
        %v1860 = vsel %vm1826, %v1859, %v1490
        %v1861 = vsel %vm1828, %v1860, %v1494
        %v1862 = vsel %vm1830, %v1861, %v1498
        %v1863 = vsel %vm1832, %v1862, %v1502
        %v1864 = vsel %vm1804, %v702, %v1506
        %v1865 = vsel %vm1806, %v1864, %v1510
        %v1866 = vsel %vm1808, %v1865, %v1514
        %v1867 = vsel %vm1810, %v1866, %v1518
        %v1868 = vsel %vm1812, %v1867, %v1522
        %v1869 = vsel %vm1814, %v1868, %v1526
        %v1870 = vsel %vm1816, %v1869, %v1530
        %v1871 = vsel %vm1818, %v1870, %v1534
        %v1872 = vsel %vm1820, %v1871, %v1538
        %v1873 = vsel %vm1822, %v1872, %v1542
        %v1874 = vsel %vm1824, %v1873, %v1546
        %v1875 = vsel %vm1826, %v1874, %v1550
        %v1876 = vsel %vm1828, %v1875, %v1554
        %v1877 = vsel %vm1830, %v1876, %v1558
        %v1878 = vsel %vm1832, %v1877, %v1562
        %v1879 = vsel %vm1804, %v834, %v1566
        %v1880 = vsel %vm1806, %v1879, %v1570
        %v1881 = vsel %vm1808, %v1880, %v1574
        %v1882 = vsel %vm1810, %v1881, %v1578
        %v1883 = vsel %vm1812, %v1882, %v1582
        %v1884 = vsel %vm1814, %v1883, %v1586
        %v1885 = vsel %vm1816, %v1884, %v1590
        %v1886 = vsel %vm1818, %v1885, %v1594
        %v1887 = vsel %vm1820, %v1886, %v1598
        %v1888 = vsel %vm1822, %v1887, %v1602
        %v1889 = vsel %vm1824, %v1888, %v1606
        %v1890 = vsel %vm1826, %v1889, %v1610
        %v1891 = vsel %vm1828, %v1890, %v1614
        %v1892 = vsel %vm1830, %v1891, %v1618
        %v1893 = vsel %vm1832, %v1892, %v1622
        %v1894 = vsel %vm1804, %v966, %v1626
        %v1895 = vsel %vm1806, %v1894, %v1630
        %v1896 = vsel %vm1808, %v1895, %v1634
        %v1897 = vsel %vm1810, %v1896, %v1638
        %v1898 = vsel %vm1812, %v1897, %v1642
        %v1899 = vsel %vm1814, %v1898, %v1646
        %v1900 = vsel %vm1816, %v1899, %v1650
        %v1901 = vsel %vm1818, %v1900, %v1654
        %v1902 = vsel %vm1820, %v1901, %v1658
        %v1903 = vsel %vm1822, %v1902, %v1662
        %v1904 = vsel %vm1824, %v1903, %v1666
        %v1905 = vsel %vm1826, %v1904, %v1670
        %v1906 = vsel %vm1828, %v1905, %v1674
        %v1907 = vsel %vm1830, %v1906, %v1678
        %v1908 = vsel %vm1832, %v1907, %v1682
        %v1909 = vsel %vm1804, %v1098, %v1686
        %v1910 = vsel %vm1806, %v1909, %v1690
        %v1911 = vsel %vm1808, %v1910, %v1694
        %v1912 = vsel %vm1810, %v1911, %v1698
        %v1913 = vsel %vm1812, %v1912, %v1702
        %v1914 = vsel %vm1814, %v1913, %v1706
        %v1915 = vsel %vm1816, %v1914, %v1710
        %v1916 = vsel %vm1818, %v1915, %v1714
        %v1917 = vsel %vm1820, %v1916, %v1718
        %v1918 = vsel %vm1822, %v1917, %v1722
        %v1919 = vsel %vm1824, %v1918, %v1726
        %v1920 = vsel %vm1826, %v1919, %v1730
        %v1921 = vsel %vm1828, %v1920, %v1734
        %v1922 = vsel %vm1830, %v1921, %v1738
        %v1923 = vsel %vm1832, %v1922, %v1742
        %v1924 = vsel %vm1804, %v1230, %v1746
        %v1925 = vsel %vm1806, %v1924, %v1750
        %v1926 = vsel %vm1808, %v1925, %v1754
        %v1927 = vsel %vm1810, %v1926, %v1758
        %v1928 = vsel %vm1812, %v1927, %v1762
        %v1929 = vsel %vm1814, %v1928, %v1766
        %v1930 = vsel %vm1816, %v1929, %v1770
        %v1931 = vsel %vm1818, %v1930, %v1774
        %v1932 = vsel %vm1820, %v1931, %v1778
        %v1933 = vsel %vm1822, %v1932, %v1782
        %v1934 = vsel %vm1824, %v1933, %v1786
        %v1935 = vsel %vm1826, %v1934, %v1790
        %v1936 = vsel %vm1828, %v1935, %v1794
        %v1937 = vsel %vm1830, %v1936, %v1798
        %v1938 = vsel %vm1832, %v1937, %v1802
        %v1947 = vcombine.low %v1833, %v1848
        %v1948 = vcombine.low %v1863, %v1878
        %v1950 = vunpack.c.l.s4 1983009808
        %v1951 = vunpack.c.0.s8 %v1950
        %v1952 = vlaneseq
        %v1953 = vshrl.u32 %v1952, 7
        %v1954 = vsub.s32 %v1951, %v1953
        %v1955 = vrot.slane %v1947, %v1954
        %v1957 = vunpack.c.l.s4 1983009808
        %v1958 = vunpack.c.0.s8 %v1957
        %v1959 = vlaneseq
        %v1960 = vshrl.u32 %v1959, 7
        %v1961 = vsub.s32 %v1958, %v1960
        %v1962 = vrot.slane %v1948, %v1961
        %v1963 = vcombine.low %v1955, %v1962
        %v1964 = vcombine.low %v1893, %v1908
        %v1965 = vcombine.low %v1923, %v1938
        %v1967 = vunpack.c.l.s4 1983009808
        %v1968 = vunpack.c.0.s8 %v1967
        %v1969 = vlaneseq
        %v1970 = vshrl.u32 %v1969, 7
        %v1971 = vsub.s32 %v1968, %v1970
        %v1972 = vrot.slane %v1964, %v1971
        %v1974 = vunpack.c.l.s4 1983009808
        %v1975 = vunpack.c.0.s8 %v1974
        %v1976 = vlaneseq
        %v1977 = vshrl.u32 %v1976, 7
        %v1978 = vsub.s32 %v1975, %v1977
        %v1979 = vrot.slane %v1965, %v1978
        %v1980 = vcombine.low %v1972, %v1979
        %1983 = vst [vmem:[%s152] sm:$0xff] %v1963
        %1984 = vst [vmem:[%s152 + $0x8] sm:$0xff] %v1980
        %s1985 = sand.u32 %s68, 1
        %s1986 = scalar_lea.sflag [#allocation4], %s1985
        %s1987 = sand.u32 %s68, 1
        %s1988 = smul.addr %s1987, 16
        %s1989 = scalar_lea.vmem [#allocation5], %s1988
        // Predicated region
        $region29: #{tpu_custom_call.1} parent=23 // pred_check
          %p1990 = pneg %p78
        $region30: #{tpu_custom_call.1} parent=23 // pred_check_branch
          %1992 = sbr.rel (%p1990) target = $region32
        $region31: #{tpu_custom_call.1} parent=23 // pred_region
          %s1993 = smul.u32 8, %s23
          %s1995 = ssub.s32 256, 256
          %1996 = vsyncadd %s1986, %s1995
          %s1997 = smul.addr %s22, 16
          %s1998 = sadd.s32 %s1993, %s1997
          %s1999 = smul.addr %s1998, 32
          %s2000 = scalar_lea.hbm %s1, %s1999
          %s2002 = sshll.u32 %s1989, 4
          %s2003 = int_to_ptr.vmem [resolvable:$true] %s2002
          %2005 = dma.vmem_to_hbm [thread:$0]  %s2003, 256, %s2000, %s1986
        $region32: #{tpu_custom_call.1} parent=23 // pred_fallthru
          _
      $region24: #{tpu_custom_call.1} parent=5 // pred_fallthru
        _
      %p2006 = scmp.le.s32.totalorder 2, %s13
      // Predicated region
      $region33: #{tpu_custom_call.1} parent=5 // pred_check
        %p2007 = pneg %p2006
      $region34: #{tpu_custom_call.1} parent=5 // pred_check_branch
        %2009 = sbr.rel (%p2007) target = $region36
      $region35: #{tpu_custom_call.1} parent=5 // pred_region
        %s2010 = ssub.s32 %s13, 2
        // Predicated region
        $region37: #{tpu_custom_call.1} parent=35 // pred_check
          %p2011 = pneg %p84
        $region38: #{tpu_custom_call.1} parent=35 // pred_check_branch
          %2013 = sbr.rel (%p2011) target = $region40
        $region39: #{tpu_custom_call.1} parent=35 // pred_region
          %s2014 = sand.u32 %s69, 1
          %s2015 = scalar_lea.sflag [#allocation4], %s2014
          %s2016 = sand.u32 %s69, 1
          %s2017 = smul.addr %s2016, 16
          %s2018 = scalar_lea.vmem [#allocation5], %s2017
          %2019 = dma.done %s2015, 256
        $region40: #{tpu_custom_call.1} parent=35 // pred_fallthru
          _
      $region36: #{tpu_custom_call.1} parent=5 // pred_fallthru
        _
    $region6: #{tpu_custom_call.1} parent=1 // loop_footer
      %s17 = sadd.s32 1, %s13
    $region7: #{tpu_custom_call.1} parent=1 // loop_footer_branch
      %12 = sbr.rel target = $region3
    $region8: #{tpu_custom_call.1} parent=1 // loop_exit
      _
    %2020 = vsyncpa [#allocation3], 1
    %s2021 = scalar_lea.sflag [#allocation3], 1
    %2022 = vsyncpa %s2021, 1
    %2023 = vsyncpa [#allocation4], 1
    %s2024 = scalar_lea.sflag [#allocation4], 1
    %2025 = vsyncpa %s2024, 1

// kernel: tpu_custom_call.1
$region0: #{tpu_custom_call.1}
  #allocation0 [shape = 'u32[]', space=smem, size = 0x4, offset = 0x4, fixed_abs, tag = 'smem constant byte address 0x4 - core index']
  #allocation1 [shape = 'u32[144,128]{1,0:T(1,128)}', space=vmem, size = 0x12000, scoped, tag = 'internal scratch']
  %s0 = inlined_call_operand.hbm [shape: f32[2,8,256], index: 0, kind: input, shape index: {}]
  %s1 = inlined_call_operand.vmem [shape: f32[2,256,8], index: 1, kind: output, shape index: {}]
  %s2 = sld [smem:[#allocation0]]
  $region41: #{tpu_custom_call.1} parent=0
    _
  %s4 = ssub.s32 1, %s2
  %s5 = scalar_select 0, %s4, %s2
  $region1: #{tpu_custom_call.1} parent=0
    #allocation2 [shape = 'u8[16384]{0}', space=vmem, size = 0x4000, scoped, tag = 'input window, operand 0']
    #allocation3 [shape = 's32[2]{0}', space=sflag, size = 0x8, scoped, tag = 'scoped memory for tpu_custom_call.1']
    %6 = vsyncpa [#allocation3], 0
    %s7 = scalar_lea.sflag [#allocation3], 1
    %8 = vsyncpa %s7, 0
    loop: start=0, step=1, limit=4
    $region2: #{tpu_custom_call.1} parent=1 // loop_pre_header
      _
    $region3: #{tpu_custom_call.1} parent=1 // loop_header
      %s10 = sphi 0, %s14
      %p11 = scmp.ge.s32.totalorder %s10, 4
      %s17 = sphi 0, %s29
      %s18 = sphi 0, %s25
      %s19 = sphi 0, %s17
      %s20 = sphi 0, %s18
      %s21 = sphi 0, %s19
      %s22 = sphi 0, %s20
      %s34 = sphi 0, %s36
      %s37 = sphi 0, %s34
      %s38 = sphi 0, %s37
      %s54 = sphi 0, %s38
      %s62 = sphi 0, %s64
      %s65 = sphi 0, %s62
      %s66 = sphi 0, %s65
      %s82 = sphi 0, %s66
    $region4: #{tpu_custom_call.1} parent=1 // loop_header_branch
      %13 = sbr.rel (%p11) target = $region8
    $region5: #{tpu_custom_call.1} parent=1 // loop_body
      %s15 = ssub.s32 %s10, 1
      %s16 = ssub.s32 %s10, 2
      %s23 = sadd.s32 1, %s18
      %p24 = scmp.ge.s32.totalorder %s23, 1
      %s25 = scalar_select %p24, 0, %s23
      %s26 = sadd.s32 1, %s17
      %s27 = scalar_select %p24, %s26, %s17
      %p28 = scmp.ge.s32.totalorder %s27, 2
      %s29 = scalar_select %p28, 0, %s27
      %s30 = ssub.s32 %s17, %s29
      %s31 = ssub.s32 %s18, %s25
      %s32 = sor.u32 %s30, %s31
      %p33 = scmp.eq.s32.totalorder %s32, 0
      %s35 = sadd.s32 %s34, 1
      %s36 = scalar_select %p33, %s34, %s35
      %p39 = pneg %p33
      %p40 = scmp.eq.s32.totalorder %s10, 1
      %p41 = por %p39, %p40
      %p42 = scmp.ne.s32.totalorder %s34, %s37
      %p43 = scmp.eq.s32.totalorder %s10, 0
      %p44 = por %p42, %p43
      %p45 = scmp.ne.s32.totalorder %s34, %s37
      %p46 = scmp.eq.s32.totalorder %s15, 1
      %p47 = por %p45, %p46
      %p48 = scmp.ne.s32.totalorder %s37, %s38
      %p49 = scmp.eq.s32.totalorder %s15, 0
      %p50 = por %p48, %p49
      %p51 = scmp.ne.s32.totalorder %s37, %s38
      %p52 = scmp.eq.s32.totalorder %s16, 1
      %p53 = por %p51, %p52
      %p55 = scmp.ne.s32.totalorder %s38, %s54
      %p56 = scmp.eq.s32.totalorder %s16, 0
      %p57 = por %p55, %p56
      %s58 = ssub.s32 %s17, %s29
      %s59 = ssub.s32 %s18, %s25
      %s60 = sor.u32 %s58, %s59
      %p61 = scmp.eq.s32.totalorder %s60, 0
      %s63 = sadd.s32 %s62, 1
      %s64 = scalar_select %p61, %s62, %s63
      %p67 = pneg %p61
      %p68 = scmp.eq.s32.totalorder %s10, 1
      %p69 = por %p67, %p68
      %p70 = scmp.ne.s32.totalorder %s62, %s65
      %p71 = scmp.eq.s32.totalorder %s10, 0
      %p72 = por %p70, %p71
      %p73 = scmp.ne.s32.totalorder %s62, %s65
      %p74 = scmp.eq.s32.totalorder %s15, 1
      %p75 = por %p73, %p74
      %p76 = scmp.ne.s32.totalorder %s65, %s66
      %p77 = scmp.eq.s32.totalorder %s15, 0
      %p78 = por %p76, %p77
      %p79 = scmp.ne.s32.totalorder %s65, %s66
      %p80 = scmp.eq.s32.totalorder %s16, 1
      %p81 = por %p79, %p80
      %p83 = scmp.ne.s32.totalorder %s66, %s82
      %p84 = scmp.eq.s32.totalorder %s16, 0
      %p85 = por %p83, %p84
      %p86 = scmp.le.s32.totalorder 1, %s10
      %p87 = scmp.lt.s32.totalorder %s10, 3
      %p88 = pnand %p86, %p87
      %p89 = pneg %p88
      // Predicated region
      $region9: #{tpu_custom_call.1} parent=5 // pred_check
        _
      $region10: #{tpu_custom_call.1} parent=5 // pred_check_branch
        %91 = sbr.rel (%p88) target = $region12
      $region11: #{tpu_custom_call.1} parent=5 // pred_region
        %s92 = ssub.s32 %s10, 1
      $region12: #{tpu_custom_call.1} parent=5 // pred_fallthru
        _
      %p93 = scmp.lt.s32.totalorder %s10, 2
      // Predicated region
      $region13: #{tpu_custom_call.1} parent=5 // pred_check
        %p94 = pneg %p93
      $region14: #{tpu_custom_call.1} parent=5 // pred_check_branch
        %96 = sbr.rel (%p94) target = $region16
      $region15: #{tpu_custom_call.1} parent=5 // pred_region
        // Predicated region
        $region17: #{tpu_custom_call.1} parent=15 // pred_check
          %p97 = pneg %p44
        $region18: #{tpu_custom_call.1} parent=15 // pred_check_branch
          %99 = sbr.rel (%p97) target = $region20
        $region19: #{tpu_custom_call.1} parent=15 // pred_region
          %s100 = sand.u32 %s34, 1
          %s101 = scalar_lea.sflag [#allocation3], %s100
          %s102 = sand.u32 %s34, 1
          %s103 = smul.addr %s102, 16
          %s104 = scalar_lea.vmem [#allocation2], %s103
          %s105 = smul.u32 2, %s18
          %s107 = ssub.s32 256, 256
          %108 = vsyncadd %s101, %s107
          %s109 = smul.addr %s17, 2
          %s110 = sadd.s32 %s105, %s109
          %s111 = smul.addr %s110, 128
          %s112 = scalar_lea.hbm %s0, %s111
          %s114 = sshll.u32 %s104, 4
          %s115 = int_to_ptr.vmem [resolvable:$true] %s114
          %117 = dma.hbm_to_vmem [thread:$0]  %s112, 256, %s115, %s101
        $region20: #{tpu_custom_call.1} parent=15 // pred_fallthru
          _
      $region16: #{tpu_custom_call.1} parent=5 // pred_fallthru
        _
      %p118 = scmp.le.s32.totalorder 1, %s10
      %p119 = scmp.lt.s32.totalorder %s10, 3
      %p120 = pnand %p118, %p119
      %p121 = pneg %p120
      // Predicated region
      $region21: #{tpu_custom_call.1} parent=5 // pred_check
        _
      $region22: #{tpu_custom_call.1} parent=5 // pred_check_branch
        %123 = sbr.rel (%p120) target = $region24
      $region23: #{tpu_custom_call.1} parent=5 // pred_region
        %s124 = ssub.s32 %s10, 1
        %s125 = sand.u32 %s37, 1
        %s126 = scalar_lea.sflag [#allocation3], %s125
        %s127 = sand.u32 %s37, 1
        %s128 = smul.addr %s127, 16
        %s129 = scalar_lea.vmem [#allocation2], %s128
        // Predicated region
        $region25: #{tpu_custom_call.1} parent=23 // pred_check
          %p130 = pneg %p50
        $region26: #{tpu_custom_call.1} parent=23 // pred_check_branch
          %132 = sbr.rel (%p130) target = $region28
        $region27: #{tpu_custom_call.1} parent=23 // pred_region
          %133 = dma.done %s126, 256
        $region28: #{tpu_custom_call.1} parent=23 // pred_fallthru
          _
        %s134 = sand.u32 %s37, 1
        %s135 = scalar_lea.sflag [#allocation3], %s134
        %s136 = sand.u32 %s37, 1
        %s137 = smul.addr %s136, 16
        %s138 = scalar_lea.vmem [#allocation2], %s137
        %p139 = pneg %p50
        %p140 = pneg %p47
        %p141 = pneg %p78
        %p142 = pneg %p75
        %s143 = smul.u32 32, %s20
        %p144 = scmp.lt.s32.totalorder %s19, 1
        %s145 = scalar_select %p144, %s19, 1
        %p146 = scmp.lt.s32.totalorder %s143, 31
        %s147 = scalar_select %p146, %s143, 31
        %s148 = smul.addr %s145, 32
        %s149 = sadd.s32 %s147, %s148
        %s150 = smul.addr %s149, 8
        %s151 = scalar_lea.vmem %s1, %s150
        %s152 = smul.u32 2, %s20
        %s153 = smul.u32 32, %s20
        %p154 = scmp.lt.s32.totalorder %s19, 1
        %s155 = scalar_select %p154, %s19, 1
        %p156 = scmp.lt.s32.totalorder %s153, 31
        %s157 = scalar_select %p156, %s153, 31
        %s158 = smul.addr %s155, 32
        %s159 = sadd.s32 %s157, %s158
        %s160 = smul.addr %s159, 8
        %s161 = scalar_lea.vmem %s1, %s160
        %s162 = smul.u32 32, %s20
        %v163 = vld [vmem:[%s129] sm:$0xff]
        %v164 = vld [vmem:[%s129 + $0x8] sm:$0xff]
        %v167 = vrot.slane %v163, 1
        %v168 = vrot.slane %v164, 1
        %v171 = vrot.slane %v163, 2
        %v172 = vrot.slane %v164, 2
        %v175 = vrot.slane %v163, 3
        %v176 = vrot.slane %v164, 3
        %v179 = vrot.slane %v163, 5
        %v180 = vrot.slane %v164, 5
        %v183 = vrot.slane %v163, 6
        %v184 = vrot.slane %v164, 6
        %v187 = vrot.slane %v163, 7
        %v188 = vrot.slane %v164, 7
        %vm191 = vcmask 1040384
        %v192 = vsel %vm191, %v163, %v167
        %v193 = vsel %vm191, %v164, %v168
        %vm194 = vcmask 1041408
        %v195 = vsel %vm194, %v192, %v171
        %v196 = vsel %vm194, %v193, %v172
        %vm197 = vcmask 1042432
        %v198 = vsel %vm197, %v195, %v175
        %v199 = vsel %vm197, %v196, %v176
        %vm200 = vcmask 1043456
        %v201 = vsel %vm200, %v198, %v179
        %v202 = vsel %vm200, %v199, %v180
        %vm203 = vcmask 1044480
        %v204 = vsel %vm203, %v201, %v183
        %v205 = vsel %vm203, %v202, %v184
        %vm206 = vcmask 1045504
        %v207 = vsel %vm206, %v204, %v187
        %v208 = vsel %vm206, %v205, %v188
        %vm209 = vcmask 1046528
        %v210 = vsel %vm209, %v207, %v163
        %v211 = vsel %vm209, %v208, %v164
        %212 = vxpose.xlu0.b32.start [1/16] %v210, 128
        %213 = vxpose.xlu0.b32.cont [2/16] 0.0, 128
        %214 = vxpose.xlu0.b32.cont [3/16] 0.0, 128
        %215 = vxpose.xlu0.b32.cont [4/16] 0.0, 128
        %216 = vxpose.xlu0.b32.cont [5/16] 0.0, 128
        %217 = vxpose.xlu0.b32.cont [6/16] 0.0, 128
        %218 = vxpose.xlu0.b32.cont [7/16] 0.0, 128
        %219 = vxpose.xlu0.b32.cont [8/16] 0.0, 128
        %220 = vxpose.xlu0.b32.cont [9/16] 0.0, 128
        %221 = vxpose.xlu0.b32.cont [10/16] 0.0, 128
        %222 = vxpose.xlu0.b32.cont [11/16] 0.0, 128
        %223 = vxpose.xlu0.b32.cont [12/16] 0.0, 128
        %224 = vxpose.xlu0.b32.cont [13/16] 0.0, 128
        %225 = vxpose.xlu0.b32.cont [14/16] 0.0, 128
        %226 = vxpose.xlu0.b32.cont [15/16] 0.0, 128
        %227 = vxpose.xlu0.b32.end [16/16] 0.0, 128
        %v228 = vpop.trf.xlu0
        %v229 = vpop.trf.xlu0
        %v230 = vpop.trf.xlu0
        %v231 = vpop.trf.xlu0
        %v232 = vpop.trf.xlu0
        %v233 = vpop.trf.xlu0
        %v234 = vpop.trf.xlu0
        %v235 = vpop.trf.xlu0
        %v236 = vpop.trf.xlu0
        %v237 = vpop.trf.xlu0
        %v238 = vpop.trf.xlu0
        %v239 = vpop.trf.xlu0
        %v240 = vpop.trf.xlu0
        %v241 = vpop.trf.xlu0
        %v242 = vpop.trf.xlu0
        %v243 = vpop.trf.xlu0
        %244 = vxpose.xlu0.b32.start [1/16] %v211, 128
        %245 = vxpose.xlu0.b32.cont [2/16] 0.0, 128
        %246 = vxpose.xlu0.b32.cont [3/16] 0.0, 128
        %247 = vxpose.xlu0.b32.cont [4/16] 0.0, 128
        %248 = vxpose.xlu0.b32.cont [5/16] 0.0, 128
        %249 = vxpose.xlu0.b32.cont [6/16] 0.0, 128
        %250 = vxpose.xlu0.b32.cont [7/16] 0.0, 128
        %251 = vxpose.xlu0.b32.cont [8/16] 0.0, 128
        %252 = vxpose.xlu0.b32.cont [9/16] 0.0, 128
        %253 = vxpose.xlu0.b32.cont [10/16] 0.0, 128
        %254 = vxpose.xlu0.b32.cont [11/16] 0.0, 128
        %255 = vxpose.xlu0.b32.cont [12/16] 0.0, 128
        %256 = vxpose.xlu0.b32.cont [13/16] 0.0, 128
        %257 = vxpose.xlu0.b32.cont [14/16] 0.0, 128
        %258 = vxpose.xlu0.b32.cont [15/16] 0.0, 128
        %259 = vxpose.xlu0.b32.end [16/16] 0.0, 128
        %v260 = vpop.trf.xlu0
        %v261 = vpop.trf.xlu0
        %v262 = vpop.trf.xlu0
        %v263 = vpop.trf.xlu0
        %v264 = vpop.trf.xlu0
        %v265 = vpop.trf.xlu0
        %v266 = vpop.trf.xlu0
        %v267 = vpop.trf.xlu0
        %v268 = vpop.trf.xlu0
        %v269 = vpop.trf.xlu0
        %v270 = vpop.trf.xlu0
        %v271 = vpop.trf.xlu0
        %v272 = vpop.trf.xlu0
        %v273 = vpop.trf.xlu0
        %v274 = vpop.trf.xlu0
        %v275 = vpop.trf.xlu0
        %vm276 = vcmask 64512
        %277 = vst.msk [vmem:[%s161] sm:$0xff] %vm276, %v228
        %278 = vst.msk [vmem:[%s161 + $0x8] sm:$0xff] %vm276, %v229
        %279 = vst.msk [vmem:[%s161 + $0x10] sm:$0xff] %vm276, %v230
        %280 = vst.msk [vmem:[%s161 + $0x18] sm:$0xff] %vm276, %v231
        %281 = vst.msk [vmem:[%s161 + $0x20] sm:$0xff] %vm276, %v232
        %282 = vst.msk [vmem:[%s161 + $0x28] sm:$0xff] %vm276, %v233
        %283 = vst.msk [vmem:[%s161 + $0x30] sm:$0xff] %vm276, %v234
        %284 = vst.msk [vmem:[%s161 + $0x38] sm:$0xff] %vm276, %v235
        %285 = vst.msk [vmem:[%s161 + $0x40] sm:$0xff] %vm276, %v236
        %286 = vst.msk [vmem:[%s161 + $0x48] sm:$0xff] %vm276, %v237
        %287 = vst.msk [vmem:[%s161 + $0x50] sm:$0xff] %vm276, %v238
        %288 = vst.msk [vmem:[%s161 + $0x58] sm:$0xff] %vm276, %v239
        %289 = vst.msk [vmem:[%s161 + $0x60] sm:$0xff] %vm276, %v240
        %290 = vst.msk [vmem:[%s161 + $0x68] sm:$0xff] %vm276, %v241
        %291 = vst.msk [vmem:[%s161 + $0x70] sm:$0xff] %vm276, %v242
        %292 = vst.msk [vmem:[%s161 + $0x78] sm:$0xff] %vm276, %v243
        %293 = vst.msk [vmem:[%s161 + $0x80] sm:$0xff] %vm276, %v260
        %294 = vst.msk [vmem:[%s161 + $0x88] sm:$0xff] %vm276, %v261
        %295 = vst.msk [vmem:[%s161 + $0x90] sm:$0xff] %vm276, %v262
        %296 = vst.msk [vmem:[%s161 + $0x98] sm:$0xff] %vm276, %v263
        %297 = vst.msk [vmem:[%s161 + $0xa0] sm:$0xff] %vm276, %v264
        %298 = vst.msk [vmem:[%s161 + $0xa8] sm:$0xff] %vm276, %v265
        %299 = vst.msk [vmem:[%s161 + $0xb0] sm:$0xff] %vm276, %v266
        %300 = vst.msk [vmem:[%s161 + $0xb8] sm:$0xff] %vm276, %v267
        %301 = vst.msk [vmem:[%s161 + $0xc0] sm:$0xff] %vm276, %v268
        %302 = vst.msk [vmem:[%s161 + $0xc8] sm:$0xff] %vm276, %v269
        %303 = vst.msk [vmem:[%s161 + $0xd0] sm:$0xff] %vm276, %v270
        %304 = vst.msk [vmem:[%s161 + $0xd8] sm:$0xff] %vm276, %v271
        %305 = vst.msk [vmem:[%s161 + $0xe0] sm:$0xff] %vm276, %v272
        %306 = vst.msk [vmem:[%s161 + $0xe8] sm:$0xff] %vm276, %v273
        %307 = vst.msk [vmem:[%s161 + $0xf0] sm:$0xff] %vm276, %v274
        %308 = vst.msk [vmem:[%s161 + $0xf8] sm:$0xff] %vm276, %v275
        %s309 = smul.u32 32, %s20
        %p310 = scmp.lt.s32.totalorder %s19, 1
        %s311 = scalar_select %p310, %s19, 1
        %p312 = scmp.lt.s32.totalorder %s309, 31
        %s313 = scalar_select %p312, %s309, 31
        %s314 = smul.addr %s311, 32
        %s315 = sadd.s32 %s313, %s314
        %s316 = smul.addr %s315, 8
        %s317 = scalar_lea.vmem %s1, %s316
        // Predicated region
        $region29: #{tpu_custom_call.1} parent=23 // pred_check
          %p318 = pneg %p75
        $region30: #{tpu_custom_call.1} parent=23 // pred_check_branch
          %320 = sbr.rel (%p318) target = $region32
        $region31: #{tpu_custom_call.1} parent=23 // pred_region
          %s321 = smul.u32 32, %s20
        $region32: #{tpu_custom_call.1} parent=23 // pred_fallthru
          _
      $region24: #{tpu_custom_call.1} parent=5 // pred_fallthru
        _
      %p322 = scmp.le.s32.totalorder 2, %s10
      // Predicated region
      $region33: #{tpu_custom_call.1} parent=5 // pred_check
        %p323 = pneg %p322
      $region34: #{tpu_custom_call.1} parent=5 // pred_check_branch
        %325 = sbr.rel (%p323) target = $region36
      $region35: #{tpu_custom_call.1} parent=5 // pred_region
        %s326 = ssub.s32 %s10, 2
        // Predicated region
        $region37: #{tpu_custom_call.1} parent=35 // pred_check
          %p327 = pneg %p81
        $region38: #{tpu_custom_call.1} parent=35 // pred_check_branch
          %329 = sbr.rel (%p327) target = $region40
        $region39: #{tpu_custom_call.1} parent=35 // pred_region
          %s330 = smul.u32 32, %s22
          %p331 = scmp.lt.s32.totalorder %s21, 1
          %s332 = scalar_select %p331, %s21, 1
          %p333 = scmp.lt.s32.totalorder %s330, 31
          %s334 = scalar_select %p333, %s330, 31
          %s335 = smul.addr %s332, 32
          %s336 = sadd.s32 %s334, %s335
          %s337 = smul.addr %s336, 8
          %s338 = scalar_lea.vmem %s1, %s337
        $region40: #{tpu_custom_call.1} parent=35 // pred_fallthru
          _
      $region36: #{tpu_custom_call.1} parent=5 // pred_fallthru
        _
    $region6: #{tpu_custom_call.1} parent=1 // loop_footer
      %s14 = sadd.s32 1, %s10
    $region7: #{tpu_custom_call.1} parent=1 // loop_footer_branch
      %9 = sbr.rel target = $region3
    $region8: #{tpu_custom_call.1} parent=1 // loop_exit
      _
    %339 = vsyncpa [#allocation3], 1
    %s340 = scalar_lea.sflag [#allocation3], 1
    %341 = vsyncpa %s340, 1

</llo_original>
